<compile_context>
chip_gen: v7x
topology: tpu7x:2x2x1
jax: 0.10.0
libtpu: 0.0.40
codegen_flags: <defaults>
</compile_context>

<pallas_src>
import math
import functools

import jax
import jax.numpy as jnp
from jax import lax
from jax.experimental import pallas as pl
from jax.experimental.pallas import tpu as pltpu  # noqa: F401


# ---------------------------------------------------------------------------
# In-kernel helpers
# ---------------------------------------------------------------------------
def _layernorm(v, g, b, eps=1e-5):
    mu = jnp.mean(v, axis=-1, keepdims=True)
    var = jnp.mean((v - mu) ** 2, axis=-1, keepdims=True)  # biased, like torch
    return (v - mu) * lax.rsqrt(var + eps) * g + b


def _gelu_exact(v):
    # nn.GELU() default = exact erf-based GELU
    return 0.5 * v * (1.0 + lax.erf(v * (1.0 / math.sqrt(2.0))))


# ---------------------------------------------------------------------------
# Pallas kernel: one invocation processes all B*T rows (whole problem in VMEM)
# ---------------------------------------------------------------------------
def block_kernel(n_head, B, T,
                 x_ref, bias_ref,
                 ln1g_ref, ln1b_ref, wqkv_ref, bqkv_ref, wo_ref, bo_ref,
                 ln2g_ref, ln2b_ref, wfc_ref, bfc_ref, wpr_ref, bpr_ref,
                 o_ref):
    x = x_ref[...]                                  # (B*T, C)
    BT, C = x.shape
    dh = C // n_head

    # ---- attention branch: x + c_proj(concat_heads(attn(ln_1(x)))) ----
    h = _layernorm(x, ln1g_ref[...], ln1b_ref[...])
    # fused QKV projection (scale already folded into the Q columns/bias)
    qkv = jnp.dot(h, wqkv_ref[...], preferred_element_type=jnp.float32) + bqkv_ref[...]
    q3 = qkv[:, 0 * C:1 * C].reshape(B, T, C)
    k3 = qkv[:, 1 * C:2 * C].reshape(B, T, C)
    v3 = qkv[:, 2 * C:3 * C].reshape(B, T, C)

    # Regroup heads into a leading batch axis: (n_head*B, T, dh), g = head*B + b.
    # TODO(synk): done with leading-axis concatenation of lane slices instead of a
    # 4-D transpose, since general non-minor transposes are not reliably lowered.
    qh = jnp.concatenate([q3[:, :, i * dh:(i + 1) * dh] for i in range(n_head)], axis=0)
    kh = jnp.concatenate([k3[:, :, i * dh:(i + 1) * dh] for i in range(n_head)], axis=0)
    vh = jnp.concatenate([v3[:, :, i * dh:(i + 1) * dh] for i in range(n_head)], axis=0)

    # batched attention scores (scale pre-folded), additive mask bias
    att = jnp.einsum('gtd,gsd->gts', qh, kh, preferred_element_type=jnp.float32)
    att = att + bias_ref[...]                        # (n_head*B, 1, T) broadcast

    # softmax with EUP reciprocal for the denominator
    m = jnp.max(att, axis=-1, keepdims=True)
    e = jnp.exp(att - m)
    p = e * pl.reciprocal(jnp.sum(e, axis=-1, keepdims=True), approx=True)

    ctx = jnp.einsum('gts,gsd->gtd', p, vh, preferred_element_type=jnp.float32)
    # back to (B*T, C): heads from the batch axis -> lane concat
    y = jnp.concatenate([ctx[i * B:(i + 1) * B] for i in range(n_head)], axis=-1)
    y = y.reshape(BT, C)

    attn_out = jnp.dot(y, wo_ref[...], preferred_element_type=jnp.float32) + bo_ref[...]
    x1 = x + attn_out                                # resid_dropout: identity (eval)

    # ---- MLP branch: x + c_proj(gelu(c_fc(ln_2(x)))) ----
    h2 = _layernorm(x1, ln2g_ref[...], ln2b_ref[...])
    f = jnp.dot(h2, wfc_ref[...], preferred_element_type=jnp.float32) + bfc_ref[...]
    f = _gelu_exact(f)
    mm = jnp.dot(f, wpr_ref[...], preferred_element_type=jnp.float32) + bpr_ref[...]
    o_ref[...] = x1 + mm                             # mlp dropout: identity (eval)


# ---------------------------------------------------------------------------
# Wrapper
# ---------------------------------------------------------------------------
@functools.partial(jax.jit, static_argnames=("n_head",))
def transformer_block(x, padding_mask, params, n_head):
    B, T, C = x.shape
    dh = C // n_head
    scale = 1.0 / math.sqrt(dh)

    # Constant-fold the attention scale into the Q projection; fuse Q|K|V.
    wqkv = jnp.concatenate([params["wq"] * scale, params["wk"], params["wv"]], axis=1)
    bqkv = jnp.concatenate([params["bq"] * scale, params["bk"], params["bv"]], axis=1)

    # Additive mask bias, head-major batch layout (g = head*B + b).
    bias_b = jnp.where(padding_mask != 0, jnp.float32(-1e30), jnp.float32(0.0))
    bias_g = jnp.tile(bias_b[:, None, :], (n_head, 1, 1))     # (n_head*B, 1, T)

    weights = [
        params["ln1_g"], params["ln1_b"], wqkv, bqkv,
        params["wo"], params["bo"],
        params["ln2_g"], params["ln2_b"],
        params["wfc"], params["bfc"], params["wpr"], params["bpr"],
    ]
    # NOTE: matmuls kept in f32 for numerical fidelity at these tiny shapes;
    # at production sizes cast operands to bf16 (keep f32 accumulation).

    xf = x.reshape(B * T, C)
    kernel = functools.partial(block_kernel, n_head, B, T)
    out = pl.pallas_call(
        kernel,
        out_shape=jax.ShapeDtypeStruct((B * T, C), x.dtype),
        # gridless: whole arrays resident in VMEM, single invocation
    )(xf, bias_g, *weights)
    return out.reshape(B, T, C)


# ---------------------------------------------------------------------------
# Pure-JAX reference (for numerical validation; mirrors the torch module)
# ---------------------------------------------------------------------------
def reference_block(x, padding_mask, p, n_head):
    def ln(v, g, b):
        mu = v.mean(-1, keepdims=True)
        var = ((v - mu) ** 2).mean(-1, keepdims=True)
        return (v - mu) / jnp.sqrt(var + 1e-5) * g + b

    B, T, C = x.shape
    dh = C // n_head
    mb = (padding_mask != 0)[:, None, :]                       # (B, 1, T)

    h = ln(x, p["ln1_g"][0], p["ln1_b"][0])
    q = h @ p["wq"] + p["bq"][0]
    k = h @ p["wk"] + p["bk"][0]
    v = h @ p["wv"] + p["bv"][0]
    outs = []
    for i in range(n_head):
        qi, ki, vi = (t[..., i * dh:(i + 1) * dh] for t in (q, k, v))
        att = jnp.einsum("btd,bsd->bts", qi, ki) / math.sqrt(dh)
        att = jnp.where(mb, -jnp.inf, att)
        att = jax.nn.softmax(att, axis=-1)
        outs.append(jnp.einsum("bts,bsd->btd", att, vi))
    y = jnp.concatenate(outs, -1)
    x1 = x + y @ p["wo"] + p["bo"][0]
    h2 = ln(x1, p["ln2_g"][0], p["ln2_b"][0])
    f = h2 @ p["wfc"] + p["bfc"][0]
    f = 0.5 * f * (1.0 + lax.erf(f / math.sqrt(2.0)))
    return x1 + f @ p["wpr"] + p["bpr"][0]


# ---------------------------------------------------------------------------
# Main
# ---------------------------------------------------------------------------
if __name__ == "__main__":
    B, T, C, n_head = 2, 8, 32, 4

    key = jax.random.PRNGKey(0)
    ks = jax.random.split(key, 16)

    def w(k, shape, scale=0.05):
        return (scale * jax.random.normal(k, shape)).astype(jnp.float32)

    params = {
        "ln1_g": jnp.ones((1, C), jnp.float32),
        "ln1_b": jnp.zeros((1, C), jnp.float32),
        # per-head q/k/v Linear(C, C//n_head) weights stacked along output dim
        "wq": w(ks[0], (C, C)), "bq": w(ks[1], (1, C)),
        "wk": w(ks[2], (C, C)), "bk": w(ks[3], (1, C)),
        "wv": w(ks[4], (C, C)), "bv": w(ks[5], (1, C)),
        "wo": w(ks[6], (C, C)), "bo": w(ks[7], (1, C)),
        "ln2_g": jnp.ones((1, C), jnp.float32),
        "ln2_b": jnp.zeros((1, C), jnp.float32),
        "wfc": w(ks[8], (C, 4 * C)), "bfc": w(ks[9], (1, 4 * C)),
        "wpr": w(ks[10], (4 * C, C)), "bpr": w(ks[11], (1, C)),
    }

    x = jax.random.normal(ks[12], (B, T, C), jnp.float32)
    # batch 0: nothing masked; batch 1: last two key positions masked
    padding_mask = jnp.array(
        [[0] * T, [0] * (T - 2) + [1, 1]], dtype=jnp.int32
    )

    out = transformer_block(x, padding_mask, params, n_head=n_head)
    out = jax.block_until_ready(out)

    ref = reference_block(x, padding_mask, params, n_head)
    assert out.shape == (B, T, C)
    max_diff = float(jnp.max(jnp.abs(out - ref)))
    assert jnp.allclose(out, ref, atol=2e-3, rtol=2e-3), max_diff

    print("KERNEL_OK")
</pallas_src>

<mosaic_0001>
module attributes {stable_mosaic.version = 11 : i64} {
  func.func @block_kernel(%arg0: memref<16x32xf32, #tpu.memory_space<vmem>>, %arg1: memref<8x1x8xf32, #tpu.memory_space<vmem>>, %arg2: memref<1x32xf32, #tpu.memory_space<vmem>>, %arg3: memref<1x32xf32, #tpu.memory_space<vmem>>, %arg4: memref<32x96xf32, #tpu.memory_space<vmem>>, %arg5: memref<1x96xf32, #tpu.memory_space<vmem>>, %arg6: memref<32x32xf32, #tpu.memory_space<vmem>>, %arg7: memref<1x32xf32, #tpu.memory_space<vmem>>, %arg8: memref<1x32xf32, #tpu.memory_space<vmem>>, %arg9: memref<1x32xf32, #tpu.memory_space<vmem>>, %arg10: memref<32x128xf32, #tpu.memory_space<vmem>>, %arg11: memref<1x128xf32, #tpu.memory_space<vmem>>, %arg12: memref<128x32xf32, #tpu.memory_space<vmem>>, %arg13: memref<1x32xf32, #tpu.memory_space<vmem>>, %arg14: memref<16x32xf32, #tpu.memory_space<vmem>>) attributes {dimension_semantics = [], scalar_prefetch = 0 : i64, scratch_operands = 0 : i64, tpu.core_type = #tpu.core_type<tc>} {
    %c0 = arith.constant 0 : index
    %c0_0 = arith.constant 0 : index
    %0 = vector.load %arg0[%c0, %c0_0] : memref<16x32xf32, #tpu.memory_space<vmem>>, vector<16x32xf32>
    %c0_1 = arith.constant 0 : index
    %c0_2 = arith.constant 0 : index
    %1 = vector.load %arg2[%c0_1, %c0_2] : memref<1x32xf32, #tpu.memory_space<vmem>>, vector<1x32xf32>
    %c0_3 = arith.constant 0 : index
    %c0_4 = arith.constant 0 : index
    %2 = vector.load %arg3[%c0_3, %c0_4] : memref<1x32xf32, #tpu.memory_space<vmem>>, vector<1x32xf32>
    %cst = arith.constant dense<0.000000e+00> : vector<16xf32>
    %3 = vector.multi_reduction <add>, %0, %cst [1] : vector<16x32xf32> to vector<16xf32>
    %4 = vector.shape_cast %3 : vector<16xf32> to vector<16x1xf32>
    %cst_5 = arith.constant 3.200000e+01 : f32
    %5 = vector.broadcast %cst_5 : f32 to vector<16x1xf32>
    %6 = arith.divf %4, %5 : vector<16x1xf32>
    %7 = vector.broadcast %6 : vector<16x1xf32> to vector<16x32xf32>
    %8 = arith.subf %0, %7 : vector<16x32xf32>
    %9 = arith.mulf %8, %8 : vector<16x32xf32>
    %cst_6 = arith.constant dense<0.000000e+00> : vector<16xf32>
    %10 = vector.multi_reduction <add>, %9, %cst_6 [1] : vector<16x32xf32> to vector<16xf32>
    %11 = vector.shape_cast %10 : vector<16xf32> to vector<16x1xf32>
    %cst_7 = arith.constant 3.200000e+01 : f32
    %12 = vector.broadcast %cst_7 : f32 to vector<16x1xf32>
    %13 = arith.divf %11, %12 : vector<16x1xf32>
    %14 = vector.broadcast %6 : vector<16x1xf32> to vector<16x32xf32>
    %15 = arith.subf %0, %14 : vector<16x32xf32>
    %cst_8 = arith.constant 9.99999974E-6 : f32
    %16 = vector.broadcast %cst_8 : f32 to vector<16x1xf32>
    %17 = arith.addf %13, %16 : vector<16x1xf32>
    %18 = math.rsqrt %17 : vector<16x1xf32>
    %19 = vector.broadcast %18 : vector<16x1xf32> to vector<16x32xf32>
    %20 = arith.mulf %15, %19 : vector<16x32xf32>
    %21 = vector.broadcast %1 : vector<1x32xf32> to vector<16x32xf32>
    %22 = arith.mulf %20, %21 : vector<16x32xf32>
    %23 = vector.broadcast %2 : vector<1x32xf32> to vector<16x32xf32>
    %24 = arith.addf %22, %23 : vector<16x32xf32>
    %c0_9 = arith.constant 0 : index
    %c0_10 = arith.constant 0 : index
    %25 = vector.load %arg4[%c0_9, %c0_10] : memref<32x96xf32, #tpu.memory_space<vmem>>, vector<32x96xf32>
    %cst_11 = arith.constant dense<0.000000e+00> : vector<16x96xf32>
    %26 = tpu.matmul %24, %25, %cst_11 {dimension_numbers = #tpu.dot_dimension_numbers<[1], [0], [0], [1], [0, 0, 1, 1], [], []>} : vector<16x32xf32>, vector<32x96xf32>, vector<16x96xf32> -> vector<16x96xf32>
    %c0_12 = arith.constant 0 : index
    %c0_13 = arith.constant 0 : index
    %27 = vector.load %arg5[%c0_12, %c0_13] : memref<1x96xf32, #tpu.memory_space<vmem>>, vector<1x96xf32>
    %28 = vector.broadcast %27 : vector<1x96xf32> to vector<16x96xf32>
    %29 = arith.addf %26, %28 : vector<16x96xf32>
    %30 = vector.extract_strided_slice %29 {offsets = [0, 0], sizes = [16, 32], strides = [1, 1]} : vector<16x96xf32> to vector<16x32xf32>
    %31 = vector.shape_cast %30 : vector<16x32xf32> to vector<2x8x32xf32>
    %32 = vector.extract_strided_slice %29 {offsets = [0, 32], sizes = [16, 32], strides = [1, 1]} : vector<16x96xf32> to vector<16x32xf32>
    %33 = vector.shape_cast %32 : vector<16x32xf32> to vector<2x8x32xf32>
    %34 = vector.extract_strided_slice %29 {offsets = [0, 64], sizes = [16, 32], strides = [1, 1]} : vector<16x96xf32> to vector<16x32xf32>
    %35 = vector.shape_cast %34 : vector<16x32xf32> to vector<2x8x32xf32>
    %36 = vector.extract_strided_slice %31 {offsets = [0, 0, 0], sizes = [2, 8, 8], strides = [1, 1, 1]} : vector<2x8x32xf32> to vector<2x8x8xf32>
    %37 = vector.extract_strided_slice %31 {offsets = [0, 0, 8], sizes = [2, 8, 8], strides = [1, 1, 1]} : vector<2x8x32xf32> to vector<2x8x8xf32>
    %38 = vector.extract_strided_slice %31 {offsets = [0, 0, 16], sizes = [2, 8, 8], strides = [1, 1, 1]} : vector<2x8x32xf32> to vector<2x8x8xf32>
    %39 = vector.extract_strided_slice %31 {offsets = [0, 0, 24], sizes = [2, 8, 8], strides = [1, 1, 1]} : vector<2x8x32xf32> to vector<2x8x8xf32>
    %40 = tpu.concatenate %36, %37, %38, %39 in 0 : vector<2x8x8xf32>, vector<2x8x8xf32>, vector<2x8x8xf32>, vector<2x8x8xf32> -> vector<8x8x8xf32>
    %41 = vector.extract_strided_slice %33 {offsets = [0, 0, 0], sizes = [2, 8, 8], strides = [1, 1, 1]} : vector<2x8x32xf32> to vector<2x8x8xf32>
    %42 = vector.extract_strided_slice %33 {offsets = [0, 0, 8], sizes = [2, 8, 8], strides = [1, 1, 1]} : vector<2x8x32xf32> to vector<2x8x8xf32>
    %43 = vector.extract_strided_slice %33 {offsets = [0, 0, 16], sizes = [2, 8, 8], strides = [1, 1, 1]} : vector<2x8x32xf32> to vector<2x8x8xf32>
    %44 = vector.extract_strided_slice %33 {offsets = [0, 0, 24], sizes = [2, 8, 8], strides = [1, 1, 1]} : vector<2x8x32xf32> to vector<2x8x8xf32>
    %45 = tpu.concatenate %41, %42, %43, %44 in 0 : vector<2x8x8xf32>, vector<2x8x8xf32>, vector<2x8x8xf32>, vector<2x8x8xf32> -> vector<8x8x8xf32>
    %46 = vector.extract_strided_slice %35 {offsets = [0, 0, 0], sizes = [2, 8, 8], strides = [1, 1, 1]} : vector<2x8x32xf32> to vector<2x8x8xf32>
    %47 = vector.extract_strided_slice %35 {offsets = [0, 0, 8], sizes = [2, 8, 8], strides = [1, 1, 1]} : vector<2x8x32xf32> to vector<2x8x8xf32>
    %48 = vector.extract_strided_slice %35 {offsets = [0, 0, 16], sizes = [2, 8, 8], strides = [1, 1, 1]} : vector<2x8x32xf32> to vector<2x8x8xf32>
    %49 = vector.extract_strided_slice %35 {offsets = [0, 0, 24], sizes = [2, 8, 8], strides = [1, 1, 1]} : vector<2x8x32xf32> to vector<2x8x8xf32>
    %50 = tpu.concatenate %46, %47, %48, %49 in 0 : vector<2x8x8xf32>, vector<2x8x8xf32>, vector<2x8x8xf32>, vector<2x8x8xf32> -> vector<8x8x8xf32>
    "tpu.trace_start"() <{level = 10 : i32, message = "gtd,gsd->gts"}> : () -> ()
    %cst_14 = arith.constant dense<0.000000e+00> : vector<8x8x8xf32>
    %51 = tpu.matmul %40, %45, %cst_14 {dimension_numbers = #tpu.dot_dimension_numbers<[2], [2], [1], [1], [0, 0, 0, 1, 1, 1], [0], [0]>} : vector<8x8x8xf32>, vector<8x8x8xf32>, vector<8x8x8xf32> -> vector<8x8x8xf32>
    "tpu.trace_stop"() : () -> ()
    %c0_15 = arith.constant 0 : index
    %c0_16 = arith.constant 0 : index
    %c0_17 = arith.constant 0 : index
    %52 = vector.load %arg1[%c0_15, %c0_16, %c0_17] : memref<8x1x8xf32, #tpu.memory_space<vmem>>, vector<8x1x8xf32>
    %53 = vector.broadcast %52 : vector<8x1x8xf32> to vector<8x8x8xf32>
    %54 = arith.addf %51, %53 : vector<8x8x8xf32>
    %cst_18 = arith.constant dense<0xFF800000> : vector<8x8xf32>
    %55 = vector.multi_reduction <maximumf>, %54, %cst_18 [2] : vector<8x8x8xf32> to vector<8x8xf32>
    %56 = vector.shape_cast %55 : vector<8x8xf32> to vector<8x8x1xf32>
    %57 = vector.broadcast %56 : vector<8x8x1xf32> to vector<8x8x8xf32>
    %58 = arith.subf %54, %57 : vector<8x8x8xf32>
    %59 = math.exp %58 : vector<8x8x8xf32>
    %cst_19 = arith.constant dense<0.000000e+00> : vector<8x8xf32>
    %60 = vector.multi_reduction <add>, %59, %cst_19 [2] : vector<8x8x8xf32> to vector<8x8xf32>
    %61 = vector.shape_cast %60 : vector<8x8xf32> to vector<8x8x1xf32>
    %62 = tpu.reciprocal %61 {approx = true} : vector<8x8x1xf32> -> vector<8x8x1xf32>
    %63 = vector.broadcast %62 : vector<8x8x1xf32> to vector<8x8x8xf32>
    %64 = arith.mulf %59, %63 : vector<8x8x8xf32>
    "tpu.trace_start"() <{level = 10 : i32, message = "gts,gsd->gtd"}> : () -> ()
    %cst_20 = arith.constant dense<0.000000e+00> : vector<8x8x8xf32>
    %65 = tpu.matmul %64, %50, %cst_20 {dimension_numbers = #tpu.dot_dimension_numbers<[2], [1], [1], [2], [0, 0, 0, 1, 1, 2], [0], [0]>} : vector<8x8x8xf32>, vector<8x8x8xf32>, vector<8x8x8xf32> -> vector<8x8x8xf32>
    "tpu.trace_stop"() : () -> ()
    %66 = vector.extract_strided_slice %65 {offsets = [0, 0, 0], sizes = [2, 8, 8], strides = [1, 1, 1]} : vector<8x8x8xf32> to vector<2x8x8xf32>
    %67 = vector.extract_strided_slice %65 {offsets = [2, 0, 0], sizes = [2, 8, 8], strides = [1, 1, 1]} : vector<8x8x8xf32> to vector<2x8x8xf32>
    %68 = vector.extract_strided_slice %65 {offsets = [4, 0, 0], sizes = [2, 8, 8], strides = [1, 1, 1]} : vector<8x8x8xf32> to vector<2x8x8xf32>
    %69 = vector.extract_strided_slice %65 {offsets = [6, 0, 0], sizes = [2, 8, 8], strides = [1, 1, 1]} : vector<8x8x8xf32> to vector<2x8x8xf32>
    %70 = tpu.concatenate %66, %67, %68, %69 in 2 : vector<2x8x8xf32>, vector<2x8x8xf32>, vector<2x8x8xf32>, vector<2x8x8xf32> -> vector<2x8x32xf32>
    %71 = vector.shape_cast %70 : vector<2x8x32xf32> to vector<16x32xf32>
    %c0_21 = arith.constant 0 : index
    %c0_22 = arith.constant 0 : index
    %72 = vector.load %arg6[%c0_21, %c0_22] : memref<32x32xf32, #tpu.memory_space<vmem>>, vector<32x32xf32>
    %cst_23 = arith.constant dense<0.000000e+00> : vector<16x32xf32>
    %73 = tpu.matmul %71, %72, %cst_23 {dimension_numbers = #tpu.dot_dimension_numbers<[1], [0], [0], [1], [0, 0, 1, 1], [], []>} : vector<16x32xf32>, vector<32x32xf32>, vector<16x32xf32> -> vector<16x32xf32>
    %c0_24 = arith.constant 0 : index
    %c0_25 = arith.constant 0 : index
    %74 = vector.load %arg7[%c0_24, %c0_25] : memref<1x32xf32, #tpu.memory_space<vmem>>, vector<1x32xf32>
    %75 = vector.broadcast %74 : vector<1x32xf32> to vector<16x32xf32>
    %76 = arith.addf %73, %75 : vector<16x32xf32>
    %77 = arith.addf %0, %76 : vector<16x32xf32>
    %c0_26 = arith.constant 0 : index
    %c0_27 = arith.constant 0 : index
    %78 = vector.load %arg8[%c0_26, %c0_27] : memref<1x32xf32, #tpu.memory_space<vmem>>, vector<1x32xf32>
    %c0_28 = arith.constant 0 : index
    %c0_29 = arith.constant 0 : index
    %79 = vector.load %arg9[%c0_28, %c0_29] : memref<1x32xf32, #tpu.memory_space<vmem>>, vector<1x32xf32>
    %cst_30 = arith.constant dense<0.000000e+00> : vector<16xf32>
    %80 = vector.multi_reduction <add>, %77, %cst_30 [1] : vector<16x32xf32> to vector<16xf32>
    %81 = vector.shape_cast %80 : vector<16xf32> to vector<16x1xf32>
    %cst_31 = arith.constant 3.200000e+01 : f32
    %82 = vector.broadcast %cst_31 : f32 to vector<16x1xf32>
    %83 = arith.divf %81, %82 : vector<16x1xf32>
    %84 = vector.broadcast %83 : vector<16x1xf32> to vector<16x32xf32>
    %85 = arith.subf %77, %84 : vector<16x32xf32>
    %86 = arith.mulf %85, %85 : vector<16x32xf32>
    %cst_32 = arith.constant dense<0.000000e+00> : vector<16xf32>
    %87 = vector.multi_reduction <add>, %86, %cst_32 [1] : vector<16x32xf32> to vector<16xf32>
    %88 = vector.shape_cast %87 : vector<16xf32> to vector<16x1xf32>
    %cst_33 = arith.constant 3.200000e+01 : f32
    %89 = vector.broadcast %cst_33 : f32 to vector<16x1xf32>
    %90 = arith.divf %88, %89 : vector<16x1xf32>
    %91 = vector.broadcast %83 : vector<16x1xf32> to vector<16x32xf32>
    %92 = arith.subf %77, %91 : vector<16x32xf32>
    %cst_34 = arith.constant 9.99999974E-6 : f32
    %93 = vector.broadcast %cst_34 : f32 to vector<16x1xf32>
    %94 = arith.addf %90, %93 : vector<16x1xf32>
    %95 = math.rsqrt %94 : vector<16x1xf32>
    %96 = vector.broadcast %95 : vector<16x1xf32> to vector<16x32xf32>
    %97 = arith.mulf %92, %96 : vector<16x32xf32>
    %98 = vector.broadcast %78 : vector<1x32xf32> to vector<16x32xf32>
    %99 = arith.mulf %97, %98 : vector<16x32xf32>
    %100 = vector.broadcast %79 : vector<1x32xf32> to vector<16x32xf32>
    %101 = arith.addf %99, %100 : vector<16x32xf32>
    %c0_35 = arith.constant 0 : index
    %c0_36 = arith.constant 0 : index
    %102 = vector.load %arg10[%c0_35, %c0_36] : memref<32x128xf32, #tpu.memory_space<vmem>>, vector<32x128xf32>
    %cst_37 = arith.constant dense<0.000000e+00> : vector<16x128xf32>
    %103 = tpu.matmul %101, %102, %cst_37 {dimension_numbers = #tpu.dot_dimension_numbers<[1], [0], [0], [1], [0, 0, 1, 1], [], []>} : vector<16x32xf32>, vector<32x128xf32>, vector<16x128xf32> -> vector<16x128xf32>
    %c0_38 = arith.constant 0 : index
    %c0_39 = arith.constant 0 : index
    %104 = vector.load %arg11[%c0_38, %c0_39] : memref<1x128xf32, #tpu.memory_space<vmem>>, vector<1x128xf32>
    %105 = vector.broadcast %104 : vector<1x128xf32> to vector<16x128xf32>
    %106 = arith.addf %103, %105 : vector<16x128xf32>
    %cst_40 = arith.constant 5.000000e-01 : f32
    %107 = vector.broadcast %cst_40 : f32 to vector<16x128xf32>
    %108 = arith.mulf %107, %106 : vector<16x128xf32>
    %cst_41 = arith.constant 0.707106769 : f32
    %109 = vector.broadcast %cst_41 : f32 to vector<16x128xf32>
    %110 = arith.mulf %106, %109 : vector<16x128xf32>
    %111 = math.erf %110 : vector<16x128xf32>
    %cst_42 = arith.constant 1.000000e+00 : f32
    %112 = vector.broadcast %cst_42 : f32 to vector<16x128xf32>
    %113 = arith.addf %112, %111 : vector<16x128xf32>
    %114 = arith.mulf %108, %113 : vector<16x128xf32>
    %c0_43 = arith.constant 0 : index
    %c0_44 = arith.constant 0 : index
    %115 = vector.load %arg12[%c0_43, %c0_44] : memref<128x32xf32, #tpu.memory_space<vmem>>, vector<128x32xf32>
    %cst_45 = arith.constant dense<0.000000e+00> : vector<16x32xf32>
    %116 = tpu.matmul %114, %115, %cst_45 {dimension_numbers = #tpu.dot_dimension_numbers<[1], [0], [0], [1], [0, 0, 1, 1], [], []>} : vector<16x128xf32>, vector<128x32xf32>, vector<16x32xf32> -> vector<16x32xf32>
    %c0_46 = arith.constant 0 : index
    %c0_47 = arith.constant 0 : index
    %117 = vector.load %arg13[%c0_46, %c0_47] : memref<1x32xf32, #tpu.memory_space<vmem>>, vector<1x32xf32>
    %118 = vector.broadcast %117 : vector<1x32xf32> to vector<16x32xf32>
    %119 = arith.addf %116, %118 : vector<16x32xf32>
    %120 = arith.addf %77, %119 : vector<16x32xf32>
    %c0_48 = arith.constant 0 : index
    %c0_49 = arith.constant 0 : index
    %121 = vector.load %arg14[%c0_48, %c0_49] : memref<16x32xf32, #tpu.memory_space<vmem>>, vector<16x32xf32>
    tpu.vector_store %arg14[%c0_48, %c0_49], %120 {strides = array<i32>} : memref<16x32xf32, #tpu.memory_space<vmem>>, vector<16x32xf32>,
    return
  }
}

</mosaic_0001>

<llo_original>
// kernel: transformer_block.1
$region0: #{transformer_block.1}
  #allocation0 [shape = 'u32[]', space=smem, size = 0x4, offset = 0x4, fixed_abs, tag = 'smem constant byte address 0x4 - core index']
  #allocation1 [shape = 'u32[144,128]{1,0:T(1,128)}', space=vmem, size = 0x12000, scoped, tag = 'internal scratch']
  %s0 = inlined_call_operand.vmem [shape: f32[16,32], index: 0, kind: input, shape index: {}]
  %s1 = inlined_call_operand.vmem [shape: f32[8,1,8], index: 1, kind: input, shape index: {}]
  %s2 = inlined_call_operand.vmem [shape: f32[1,32], index: 2, kind: input, shape index: {}]
  %s3 = inlined_call_operand.vmem [shape: f32[1,32], index: 3, kind: input, shape index: {}]
  %s4 = inlined_call_operand.vmem [shape: f32[32,96], index: 4, kind: input, shape index: {}]
  %s5 = inlined_call_operand.vmem [shape: f32[1,96], index: 5, kind: input, shape index: {}]
  %s6 = inlined_call_operand.vmem [shape: f32[32,32], index: 6, kind: input, shape index: {}]
  %s7 = inlined_call_operand.vmem [shape: f32[1,32], index: 7, kind: input, shape index: {}]
  %s8 = inlined_call_operand.vmem [shape: f32[1,32], index: 8, kind: input, shape index: {}]
  %s9 = inlined_call_operand.vmem [shape: f32[1,32], index: 9, kind: input, shape index: {}]
  %s10 = inlined_call_operand.vmem [shape: f32[32,128], index: 10, kind: input, shape index: {}]
  %s11 = inlined_call_operand.vmem [shape: f32[1,128], index: 11, kind: input, shape index: {}]
  %s12 = inlined_call_operand.vmem [shape: f32[128,32], index: 12, kind: input, shape index: {}]
  %s13 = inlined_call_operand.vmem [shape: f32[1,32], index: 13, kind: input, shape index: {}]
  %s14 = inlined_call_operand.hbm [shape: f32[16,32], index: 14, kind: output, shape index: {}]
  %s15 = sld [smem:[#allocation0]]
  $region66: #{transformer_block.1} parent=0
    _
  %s17 = ssub.s32 1, %s15
  %s18 = scalar_select 0, %s17, %s15
  $region1: #{transformer_block.1} parent=0
    #allocation2 [shape = 'u8[8192]{0}', space=vmem, size = 0x2000, scoped, tag = 'output window, operand 0, single buffered']
    #allocation3 [shape = 's32[1]{0}', space=sflag, size = 0x4, scoped, tag = 'scoped memory for transformer_block.1']
    %19 = vsyncpa [#allocation3], 0
    // Predicated region
    $region2: #{transformer_block.1} parent=1 // pred_check
      _
    $region3: #{transformer_block.1} parent=1 // pred_check_branch
      %21 = sbr.rel (0) target = $region5
    $region4: #{transformer_block.1} parent=1 // pred_region
      _
    $region5: #{transformer_block.1} parent=1 // pred_fallthru
      _
    // Predicated region
    $region6: #{transformer_block.1} parent=1 // pred_check
      _
    $region7: #{transformer_block.1} parent=1 // pred_check_branch
      %23 = sbr.rel (0) target = $region9
    $region8: #{transformer_block.1} parent=1 // pred_region
      _
    $region9: #{transformer_block.1} parent=1 // pred_fallthru
      _
    // Predicated region
    $region10: #{transformer_block.1} parent=1 // pred_check
      _
    $region11: #{transformer_block.1} parent=1 // pred_check_branch
      %25 = sbr.rel (0) target = $region13
    $region12: #{transformer_block.1} parent=1 // pred_region
      _
    $region13: #{transformer_block.1} parent=1 // pred_fallthru
      _
    // Predicated region
    $region14: #{transformer_block.1} parent=1 // pred_check
      _
    $region15: #{transformer_block.1} parent=1 // pred_check_branch
      %27 = sbr.rel (0) target = $region17
    $region16: #{transformer_block.1} parent=1 // pred_region
      _
    $region17: #{transformer_block.1} parent=1 // pred_fallthru
      _
    // Predicated region
    $region18: #{transformer_block.1} parent=1 // pred_check
      _
    $region19: #{transformer_block.1} parent=1 // pred_check_branch
      %29 = sbr.rel (0) target = $region21
    $region20: #{transformer_block.1} parent=1 // pred_region
      _
    $region21: #{transformer_block.1} parent=1 // pred_fallthru
      _
    // Predicated region
    $region22: #{transformer_block.1} parent=1 // pred_check
      _
    $region23: #{transformer_block.1} parent=1 // pred_check_branch
      %31 = sbr.rel (0) target = $region25
    $region24: #{transformer_block.1} parent=1 // pred_region
      _
    $region25: #{transformer_block.1} parent=1 // pred_fallthru
      _
    // Predicated region
    $region26: #{transformer_block.1} parent=1 // pred_check
      _
    $region27: #{transformer_block.1} parent=1 // pred_check_branch
      %33 = sbr.rel (0) target = $region29
    $region28: #{transformer_block.1} parent=1 // pred_region
      _
    $region29: #{transformer_block.1} parent=1 // pred_fallthru
      _
    // Predicated region
    $region30: #{transformer_block.1} parent=1 // pred_check
      _
    $region31: #{transformer_block.1} parent=1 // pred_check_branch
      %35 = sbr.rel (0) target = $region33
    $region32: #{transformer_block.1} parent=1 // pred_region
      _
    $region33: #{transformer_block.1} parent=1 // pred_fallthru
      _
    // Predicated region
    $region34: #{transformer_block.1} parent=1 // pred_check
      _
    $region35: #{transformer_block.1} parent=1 // pred_check_branch
      %37 = sbr.rel (0) target = $region37
    $region36: #{transformer_block.1} parent=1 // pred_region
      _
    $region37: #{transformer_block.1} parent=1 // pred_fallthru
      _
    // Predicated region
    $region38: #{transformer_block.1} parent=1 // pred_check
      _
    $region39: #{transformer_block.1} parent=1 // pred_check_branch
      %39 = sbr.rel (0) target = $region41
    $region40: #{transformer_block.1} parent=1 // pred_region
      _
    $region41: #{transformer_block.1} parent=1 // pred_fallthru
      _
    // Predicated region
    $region42: #{transformer_block.1} parent=1 // pred_check
      _
    $region43: #{transformer_block.1} parent=1 // pred_check_branch
      %41 = sbr.rel (0) target = $region45
    $region44: #{transformer_block.1} parent=1 // pred_region
      _
    $region45: #{transformer_block.1} parent=1 // pred_fallthru
      _
    // Predicated region
    $region46: #{transformer_block.1} parent=1 // pred_check
      _
    $region47: #{transformer_block.1} parent=1 // pred_check_branch
      %43 = sbr.rel (0) target = $region49
    $region48: #{transformer_block.1} parent=1 // pred_region
      _
    $region49: #{transformer_block.1} parent=1 // pred_fallthru
      _
    // Predicated region
    $region50: #{transformer_block.1} parent=1 // pred_check
      _
    $region51: #{transformer_block.1} parent=1 // pred_check_branch
      %45 = sbr.rel (0) target = $region53
    $region52: #{transformer_block.1} parent=1 // pred_region
      _
    $region53: #{transformer_block.1} parent=1 // pred_fallthru
      _
    // Predicated region
    $region54: #{transformer_block.1} parent=1 // pred_check
      _
    $region55: #{transformer_block.1} parent=1 // pred_check_branch
      %47 = sbr.rel (0) target = $region57
    $region56: #{transformer_block.1} parent=1 // pred_region
      _
    $region57: #{transformer_block.1} parent=1 // pred_fallthru
      _
    %v48 = vld [vmem:[%s0] sm:$0xff]
    %v49 = vld [vmem:[%s0 + $0x8] sm:$0xff]
    %v50 = vld [vmem:[%s2] sm:$0x1]
    %v51 = vld [vmem:[%s3] sm:$0x1]
    %vm52 = vcmask 261120
    %v53 = vsel %vm52, %v48, 0.0
    %54 = vadd.xlane.f32.xlu0 %v53
    %v55 = vpop.xlane.xlu0 %54
    %v56 = vsel %vm52, %v49, 0.0
    %57 = vadd.xlane.f32.xlu0 %v56
    %v58 = vpop.xlane.xlu0 %57
    %v59 = vrcp.pop 32.0
    %v60 = vmul.f32 %v55, %v59
    %v61 = vmul.f32 %v58, %v59
    %v62 = vsub.f32 %v48, %v60
    %v63 = vsub.f32 %v49, %v61
    %v64 = vmul.f32 %v62, %v62
    %v65 = vmul.f32 %v63, %v63
    %v66 = vsel %vm52, %v64, 0.0
    %67 = vadd.xlane.f32.xlu0 %v66
    %v68 = vpop.xlane.xlu0 %67
    %v69 = vsel %vm52, %v65, 0.0
    %70 = vadd.xlane.f32.xlu0 %v69
    %v71 = vpop.xlane.xlu0 %70
    %v72 = vmul.f32 %v68, %v59
    %v73 = vmul.f32 %v71, %v59
    %v74 = vadd.f32 %v72, 1e-05
    %v75 = vadd.f32 %v73, 1e-05
    %v76 = vrsqrt.pop %v74
    %v77 = vrsqrt.pop %v75
    %v78 = vmul.f32 %v62, %v76
    %v79 = vmul.f32 %v63, %v77
    %v81 = vlaneseq
    %v82 = vshrl.u32 %v81, 7
    %v83 = vsub.s32 0, %v82
    %v84 = vrot.slane %v50, %v83
    %v86 = vmul.f32 %v78, %v84
    %v87 = vmul.f32 %v79, %v84
    %v89 = vlaneseq
    %v90 = vshrl.u32 %v89, 7
    %v91 = vsub.s32 0, %v90
    %v92 = vrot.slane %v51, %v91
    %v94 = vadd.f32 %v86, %v92
    %v95 = vadd.f32 %v87, %v92
    %v96 = vld [vmem:[%s4] sm:$0xff]
    %v97 = vld [vmem:[%s4 + $0x8] sm:$0xff]
    %v98 = vld [vmem:[%s4 + $0x10] sm:$0xff]
    %v99 = vld [vmem:[%s4 + $0x18] sm:$0xff]
    %v100 = vld [vmem:[%s5] sm:$0x1]
    %v102 = vlaneseq
    %v103 = vshrl.u32 %v102, 7
    %v104 = vsub.s32 0, %v103
    %v105 = vrot.slane %v100, %v104
    %v108 = vsel %vm52, %v94, 0
    %v111 = vsel %vm52, %v95, 0
    %113 = vmatprep.subr.mxu0 0.0
    %114 = vmatpush1.msra.mxu0 %v96
    %115 = vmatprep.subr.mxu0 0.0
    %116 = vmatpush1.msra.mxu0 %v97
    %117 = vmatprep.subr.mxu0 0.0
    %118 = vmatpush1.msra.mxu0 %v98
    %119 = vmatprep.subr.mxu0 0.0
    %120 = vmatpush1.msra.mxu0 %v99
    %121 = vmatprep.subr.mxu0 0.0
    %122 = vmatpush1.msra.mxu0 0.0
    %123 = vmatprep.subr.mxu0 0.0
    %124 = vmatpush1.msra.mxu0 0.0
    %125 = vmatprep.subr.mxu0 0.0
    %126 = vmatpush1.msra.mxu0 0.0
    %127 = vmatprep.subr.mxu0 0.0
    %128 = vmatpush1.msra.mxu0 0.0
    %129 = vmatprep.subr.mxu0 0.0
    %130 = vmatpush1.msra.mxu0 0.0
    %131 = vmatprep.subr.mxu0 0.0
    %132 = vmatpush1.msra.mxu0 0.0
    %133 = vmatprep.subr.mxu0 0.0
    %134 = vmatpush1.msra.mxu0 0.0
    %135 = vmatprep.subr.mxu0 0.0
    %136 = vmatpush1.msra.mxu0 0.0
    %137 = vmatprep.subr.mxu0 0.0
    %138 = vmatpush1.msra.mxu0 0.0
    %139 = vmatprep.subr.mxu0 0.0
    %140 = vmatpush1.msra.mxu0 0.0
    %141 = vmatprep.subr.mxu0 0.0
    %142 = vmatpush1.msra.mxu0 0.0
    %143 = vmatprep.subr.mxu0 0.0
    %144 = vmatpush1.msra.mxu0 0.0
    %145 = vmatprep.subr.mxu0 0.0
    %146 = vmatpush1.msra.mxu0 0.0
    %147 = vmatprep.subr.mxu0 0.0
    %148 = vmatpush1.msra.mxu0 0.0
    %149 = vmatprep.subr.mxu0 0.0
    %150 = vmatpush1.msra.mxu0 0.0
    %151 = vmatprep.subr.mxu0 0.0
    %152 = vmatpush1.msra.mxu0 0.0
    %153 = vmatprep.subr.mxu0 0.0
    %154 = vmatpush1.msra.mxu0 0.0
    %155 = vmatprep.subr.mxu0 0.0
    %156 = vmatpush1.msra.mxu0 0.0
    %157 = vmatprep.subr.mxu0 0.0
    %158 = vmatpush1.msra.mxu0 0.0
    %159 = vmatprep.subr.mxu0 0.0
    %160 = vmatpush1.msra.mxu0 0.0
    %161 = vmatprep.subr.mxu0 0.0
    %162 = vmatpush1.msra.mxu0 0.0
    %163 = vmatprep.subr.mxu0 0.0
    %164 = vmatpush1.msra.mxu0 0.0
    %165 = vmatprep.subr.mxu0 0.0
    %166 = vmatpush1.msra.mxu0 0.0
    %167 = vmatprep.subr.mxu0 0.0
    %168 = vmatpush1.msra.mxu0 0.0
    %169 = vmatprep.subr.mxu0 0.0
    %170 = vmatpush1.msra.mxu0 0.0
    %171 = vmatprep.subr.mxu0 0.0
    %172 = vmatpush1.msra.mxu0 0.0
    %173 = vmatprep.subr.mxu0 0.0
    %174 = vmatpush1.msra.mxu0 0.0
    %175 = vmatprep.subr.mxu0 0.0
    %176 = vmatpush1.msra.mxu0 0.0
    %177 = vmatprep.mubr.f32.mxu0 0.0
    %178 = vmatmul.mubr.f32.gmra.mrb[0].mxu0 %v108
    %v179 = vpop.f32.mrb[0].mxu0
    %v180 = vadd.f32 %v105, %v179
    %v181 = vpop.f32.mrb[0].mxu0
    %182 = vmatprep.mubr.f32.mxu0 0.0
    %183 = vmatmul.mubr.f32.gmra.mrb[0].mxu0 %v111
    %v184 = vpop.f32.mrb[0].mxu0
    %v185 = vadd.f32 %v105, %v184
    %v186 = vpop.f32.mrb[0].mxu0
    %187 = vdwg.mxu0
    %190 = vrot.lane.b32.xlu0 %v180, 120
    %v191 = vpop.permute.xlu0 %190
    %192 = vrot.lane.b32.xlu0 %v185, 120
    %v193 = vpop.permute.xlu0 %192
    %194 = vrot.lane.b32.xlu0 %v180, 112
    %v195 = vpop.permute.xlu0 %194
    %196 = vrot.lane.b32.xlu0 %v185, 112
    %v197 = vpop.permute.xlu0 %196
    %198 = vrot.lane.b32.xlu0 %v180, 104
    %v199 = vpop.permute.xlu0 %198
    %200 = vrot.lane.b32.xlu0 %v185, 104
    %v201 = vpop.permute.xlu0 %200
    %v202 = vld [vmem:[%s1] sm:$0x1]
    %v203 = vld [vmem:[%s1 + $0x1] sm:$0x1]
    %v204 = vld [vmem:[%s1 + $0x2] sm:$0x1]
    %v205 = vld [vmem:[%s1 + $0x3] sm:$0x1]
    %v206 = vld [vmem:[%s1 + $0x4] sm:$0x1]
    %v207 = vld [vmem:[%s1 + $0x5] sm:$0x1]
    %v208 = vld [vmem:[%s1 + $0x6] sm:$0x1]
    %v209 = vld [vmem:[%s1 + $0x7] sm:$0x1]
    %v218 = vlaneseq
    %v219 = vshrl.u32 %v218, 7
    %v220 = vsub.s32 0, %v219
    %v221 = vrot.slane %v202, %v220
    %v222 = vlaneseq
    %v223 = vshrl.u32 %v222, 7
    %v224 = vsub.s32 0, %v223
    %v225 = vrot.slane %v203, %v224
    %v226 = vlaneseq
    %v227 = vshrl.u32 %v226, 7
    %v228 = vsub.s32 0, %v227
    %v229 = vrot.slane %v204, %v228
    %v230 = vlaneseq
    %v231 = vshrl.u32 %v230, 7
    %v232 = vsub.s32 0, %v231
    %v233 = vrot.slane %v205, %v232
    %v234 = vlaneseq
    %v235 = vshrl.u32 %v234, 7
    %v236 = vsub.s32 0, %v235
    %v237 = vrot.slane %v206, %v236
    %v238 = vlaneseq
    %v239 = vshrl.u32 %v238, 7
    %v240 = vsub.s32 0, %v239
    %v241 = vrot.slane %v207, %v240
    %v242 = vlaneseq
    %v243 = vshrl.u32 %v242, 7
    %v244 = vsub.s32 0, %v243
    %v245 = vrot.slane %v208, %v244
    %v246 = vlaneseq
    %v247 = vshrl.u32 %v246, 7
    %v248 = vsub.s32 0, %v247
    %v249 = vrot.slane %v209, %v248
    %258 = vrot.lane.b32.xlu0 %v180, 96
    %v259 = vpop.permute.xlu0 %258
    %vm260 = vcmask 64512
    %v261 = vsel %vm260, %v180, 0
    %v263 = vsel %vm260, %v259, 0
    %265 = vmatprep.subr.mxu0 0.0
    %266 = vmatpush1.xpose.msra.mxu0 %v263
    %267 = vmatprep.subr.mxu0 0.0
    %268 = vmatpush1.xpose.msra.mxu0 0.0
    %269 = vmatprep.subr.mxu0 0.0
    %270 = vmatpush1.xpose.msra.mxu0 0.0
    %271 = vmatprep.subr.mxu0 0.0
    %272 = vmatpush1.xpose.msra.mxu0 0.0
    %273 = vmatprep.subr.mxu0 0.0
    %274 = vmatpush1.xpose.msra.mxu0 0.0
    %275 = vmatprep.subr.mxu0 0.0
    %276 = vmatpush1.xpose.msra.mxu0 0.0
    %277 = vmatprep.subr.mxu0 0.0
    %278 = vmatpush1.xpose.msra.mxu0 0.0
    %279 = vmatprep.subr.mxu0 0.0
    %280 = vmatpush1.xpose.msra.mxu0 0.0
    %281 = vmatprep.subr.mxu0 0.0
    %282 = vmatpush1.xpose.msra.mxu0 0.0
    %283 = vmatprep.subr.mxu0 0.0
    %284 = vmatpush1.xpose.msra.mxu0 0.0
    %285 = vmatprep.subr.mxu0 0.0
    %286 = vmatpush1.xpose.msra.mxu0 0.0
    %287 = vmatprep.subr.mxu0 0.0
    %288 = vmatpush1.xpose.msra.mxu0 0.0
    %289 = vmatprep.subr.mxu0 0.0
    %290 = vmatpush1.xpose.msra.mxu0 0.0
    %291 = vmatprep.subr.mxu0 0.0
    %292 = vmatpush1.xpose.msra.mxu0 0.0
    %293 = vmatprep.subr.mxu0 0.0
    %294 = vmatpush1.xpose.msra.mxu0 0.0
    %295 = vmatprep.subr.mxu0 0.0
    %296 = vmatpush1.xpose.msra.mxu0 0.0
    %297 = vmatprep.subr.mxu0 0.0
    %298 = vmatpush1.xpose.msra.mxu0 0.0
    %299 = vmatprep.subr.mxu0 0.0
    %300 = vmatpush1.xpose.msra.mxu0 0.0
    %301 = vmatprep.subr.mxu0 0.0
    %302 = vmatpush1.xpose.msra.mxu0 0.0
    %303 = vmatprep.subr.mxu0 0.0
    %304 = vmatpush1.xpose.msra.mxu0 0.0
    %305 = vmatprep.subr.mxu0 0.0
    %306 = vmatpush1.xpose.msra.mxu0 0.0
    %307 = vmatprep.subr.mxu0 0.0
    %308 = vmatpush1.xpose.msra.mxu0 0.0
    %309 = vmatprep.subr.mxu0 0.0
    %310 = vmatpush1.xpose.msra.mxu0 0.0
    %311 = vmatprep.subr.mxu0 0.0
    %312 = vmatpush1.xpose.msra.mxu0 0.0
    %313 = vmatprep.subr.mxu0 0.0
    %314 = vmatpush1.xpose.msra.mxu0 0.0
    %315 = vmatprep.subr.mxu0 0.0
    %316 = vmatpush1.xpose.msra.mxu0 0.0
    %317 = vmatprep.subr.mxu0 0.0
    %318 = vmatpush1.xpose.msra.mxu0 0.0
    %319 = vmatprep.subr.mxu0 0.0
    %320 = vmatpush1.xpose.msra.mxu0 0.0
    %321 = vmatprep.subr.mxu0 0.0
    %322 = vmatpush1.xpose.msra.mxu0 0.0
    %323 = vmatprep.subr.mxu0 0.0
    %324 = vmatpush1.xpose.msra.mxu0 0.0
    %325 = vmatprep.subr.mxu0 0.0
    %326 = vmatpush1.xpose.msra.mxu0 0.0
    %327 = vmatprep.subr.mxu0 0.0
    %328 = vmatpush1.xpose.msra.mxu0 0.0
    %329 = vmatprep.mubr.f32.mxu0 0.0
    %330 = vmatmul.mubr.f32.gmra.mrb[0].mxu0 %v261
    %v331 = vpop.f32.mrb[0].mxu0
    %v332 = vadd.f32 %v221, %v331
    %v333 = vpop.f32.mrb[0].mxu0
    %334 = vdwg.mxu0
    %335 = vrot.lane.b32.xlu0 %v185, 96
    %v336 = vpop.permute.xlu0 %335
    %v337 = vsel %vm260, %v185, 0
    %v339 = vsel %vm260, %v336, 0
    %341 = vmatprep.subr.mxu0 0.0
    %342 = vmatpush1.xpose.msra.mxu0 %v339
    %343 = vmatprep.subr.mxu0 0.0
    %344 = vmatpush1.xpose.msra.mxu0 0.0
    %345 = vmatprep.subr.mxu0 0.0
    %346 = vmatpush1.xpose.msra.mxu0 0.0
    %347 = vmatprep.subr.mxu0 0.0
    %348 = vmatpush1.xpose.msra.mxu0 0.0
    %349 = vmatprep.subr.mxu0 0.0
    %350 = vmatpush1.xpose.msra.mxu0 0.0
    %351 = vmatprep.subr.mxu0 0.0
    %352 = vmatpush1.xpose.msra.mxu0 0.0
    %353 = vmatprep.subr.mxu0 0.0
    %354 = vmatpush1.xpose.msra.mxu0 0.0
    %355 = vmatprep.subr.mxu0 0.0
    %356 = vmatpush1.xpose.msra.mxu0 0.0
    %357 = vmatprep.subr.mxu0 0.0
    %358 = vmatpush1.xpose.msra.mxu0 0.0
    %359 = vmatprep.subr.mxu0 0.0
    %360 = vmatpush1.xpose.msra.mxu0 0.0
    %361 = vmatprep.subr.mxu0 0.0
    %362 = vmatpush1.xpose.msra.mxu0 0.0
    %363 = vmatprep.subr.mxu0 0.0
    %364 = vmatpush1.xpose.msra.mxu0 0.0
    %365 = vmatprep.subr.mxu0 0.0
    %366 = vmatpush1.xpose.msra.mxu0 0.0
    %367 = vmatprep.subr.mxu0 0.0
    %368 = vmatpush1.xpose.msra.mxu0 0.0
    %369 = vmatprep.subr.mxu0 0.0
    %370 = vmatpush1.xpose.msra.mxu0 0.0
    %371 = vmatprep.subr.mxu0 0.0
    %372 = vmatpush1.xpose.msra.mxu0 0.0
    %373 = vmatprep.subr.mxu0 0.0
    %374 = vmatpush1.xpose.msra.mxu0 0.0
    %375 = vmatprep.subr.mxu0 0.0
    %376 = vmatpush1.xpose.msra.mxu0 0.0
    %377 = vmatprep.subr.mxu0 0.0
    %378 = vmatpush1.xpose.msra.mxu0 0.0
    %379 = vmatprep.subr.mxu0 0.0
    %380 = vmatpush1.xpose.msra.mxu0 0.0
    %381 = vmatprep.subr.mxu0 0.0
    %382 = vmatpush1.xpose.msra.mxu0 0.0
    %383 = vmatprep.subr.mxu0 0.0
    %384 = vmatpush1.xpose.msra.mxu0 0.0
    %385 = vmatprep.subr.mxu0 0.0
    %386 = vmatpush1.xpose.msra.mxu0 0.0
    %387 = vmatprep.subr.mxu0 0.0
    %388 = vmatpush1.xpose.msra.mxu0 0.0
    %389 = vmatprep.subr.mxu0 0.0
    %390 = vmatpush1.xpose.msra.mxu0 0.0
    %391 = vmatprep.subr.mxu0 0.0
    %392 = vmatpush1.xpose.msra.mxu0 0.0
    %393 = vmatprep.subr.mxu0 0.0
    %394 = vmatpush1.xpose.msra.mxu0 0.0
    %395 = vmatprep.subr.mxu0 0.0
    %396 = vmatpush1.xpose.msra.mxu0 0.0
    %397 = vmatprep.subr.mxu0 0.0
    %398 = vmatpush1.xpose.msra.mxu0 0.0
    %399 = vmatprep.subr.mxu0 0.0
    %400 = vmatpush1.xpose.msra.mxu0 0.0
    %401 = vmatprep.subr.mxu0 0.0
    %402 = vmatpush1.xpose.msra.mxu0 0.0
    %403 = vmatprep.subr.mxu0 0.0
    %404 = vmatpush1.xpose.msra.mxu0 0.0
    %405 = vmatprep.mubr.f32.mxu0 0.0
    %406 = vmatmul.mubr.f32.gmra.mrb[0].mxu0 %v337
    %v407 = vpop.f32.mrb[0].mxu0
    %v408 = vadd.f32 %v225, %v407
    %v409 = vpop.f32.mrb[0].mxu0
    %410 = vdwg.mxu0
    %411 = vrot.lane.b32.xlu0 %v191, 96
    %v412 = vpop.permute.xlu0 %411
    %v413 = vsel %vm260, %v191, 0
    %v415 = vsel %vm260, %v412, 0
    %417 = vmatprep.subr.mxu0 0.0
    %418 = vmatpush1.xpose.msra.mxu0 %v415
    %419 = vmatprep.subr.mxu0 0.0
    %420 = vmatpush1.xpose.msra.mxu0 0.0
    %421 = vmatprep.subr.mxu0 0.0
    %422 = vmatpush1.xpose.msra.mxu0 0.0
    %423 = vmatprep.subr.mxu0 0.0
    %424 = vmatpush1.xpose.msra.mxu0 0.0
    %425 = vmatprep.subr.mxu0 0.0
    %426 = vmatpush1.xpose.msra.mxu0 0.0
    %427 = vmatprep.subr.mxu0 0.0
    %428 = vmatpush1.xpose.msra.mxu0 0.0
    %429 = vmatprep.subr.mxu0 0.0
    %430 = vmatpush1.xpose.msra.mxu0 0.0
    %431 = vmatprep.subr.mxu0 0.0
    %432 = vmatpush1.xpose.msra.mxu0 0.0
    %433 = vmatprep.subr.mxu0 0.0
    %434 = vmatpush1.xpose.msra.mxu0 0.0
    %435 = vmatprep.subr.mxu0 0.0
    %436 = vmatpush1.xpose.msra.mxu0 0.0
    %437 = vmatprep.subr.mxu0 0.0
    %438 = vmatpush1.xpose.msra.mxu0 0.0
    %439 = vmatprep.subr.mxu0 0.0
    %440 = vmatpush1.xpose.msra.mxu0 0.0
    %441 = vmatprep.subr.mxu0 0.0
    %442 = vmatpush1.xpose.msra.mxu0 0.0
    %443 = vmatprep.subr.mxu0 0.0
    %444 = vmatpush1.xpose.msra.mxu0 0.0
    %445 = vmatprep.subr.mxu0 0.0
    %446 = vmatpush1.xpose.msra.mxu0 0.0
    %447 = vmatprep.subr.mxu0 0.0
    %448 = vmatpush1.xpose.msra.mxu0 0.0
    %449 = vmatprep.subr.mxu0 0.0
    %450 = vmatpush1.xpose.msra.mxu0 0.0
    %451 = vmatprep.subr.mxu0 0.0
    %452 = vmatpush1.xpose.msra.mxu0 0.0
    %453 = vmatprep.subr.mxu0 0.0
    %454 = vmatpush1.xpose.msra.mxu0 0.0
    %455 = vmatprep.subr.mxu0 0.0
    %456 = vmatpush1.xpose.msra.mxu0 0.0
    %457 = vmatprep.subr.mxu0 0.0
    %458 = vmatpush1.xpose.msra.mxu0 0.0
    %459 = vmatprep.subr.mxu0 0.0
    %460 = vmatpush1.xpose.msra.mxu0 0.0
    %461 = vmatprep.subr.mxu0 0.0
    %462 = vmatpush1.xpose.msra.mxu0 0.0
    %463 = vmatprep.subr.mxu0 0.0
    %464 = vmatpush1.xpose.msra.mxu0 0.0
    %465 = vmatprep.subr.mxu0 0.0
    %466 = vmatpush1.xpose.msra.mxu0 0.0
    %467 = vmatprep.subr.mxu0 0.0
    %468 = vmatpush1.xpose.msra.mxu0 0.0
    %469 = vmatprep.subr.mxu0 0.0
    %470 = vmatpush1.xpose.msra.mxu0 0.0
    %471 = vmatprep.subr.mxu0 0.0
    %472 = vmatpush1.xpose.msra.mxu0 0.0
    %473 = vmatprep.subr.mxu0 0.0
    %474 = vmatpush1.xpose.msra.mxu0 0.0
    %475 = vmatprep.subr.mxu0 0.0
    %476 = vmatpush1.xpose.msra.mxu0 0.0
    %477 = vmatprep.subr.mxu0 0.0
    %478 = vmatpush1.xpose.msra.mxu0 0.0
    %479 = vmatprep.subr.mxu0 0.0
    %480 = vmatpush1.xpose.msra.mxu0 0.0
    %481 = vmatprep.mubr.f32.mxu0 0.0
    %482 = vmatmul.mubr.f32.gmra.mrb[0].mxu0 %v413
    %v483 = vpop.f32.mrb[0].mxu0
    %v484 = vadd.f32 %v229, %v483
    %v485 = vpop.f32.mrb[0].mxu0
    %486 = vdwg.mxu0
    %487 = vrot.lane.b32.xlu0 %v193, 96
    %v488 = vpop.permute.xlu0 %487
    %v489 = vsel %vm260, %v193, 0
    %v491 = vsel %vm260, %v488, 0
    %493 = vmatprep.subr.mxu0 0.0
    %494 = vmatpush1.xpose.msra.mxu0 %v491
    %495 = vmatprep.subr.mxu0 0.0
    %496 = vmatpush1.xpose.msra.mxu0 0.0
    %497 = vmatprep.subr.mxu0 0.0
    %498 = vmatpush1.xpose.msra.mxu0 0.0
    %499 = vmatprep.subr.mxu0 0.0
    %500 = vmatpush1.xpose.msra.mxu0 0.0
    %501 = vmatprep.subr.mxu0 0.0
    %502 = vmatpush1.xpose.msra.mxu0 0.0
    %503 = vmatprep.subr.mxu0 0.0
    %504 = vmatpush1.xpose.msra.mxu0 0.0
    %505 = vmatprep.subr.mxu0 0.0
    %506 = vmatpush1.xpose.msra.mxu0 0.0
    %507 = vmatprep.subr.mxu0 0.0
    %508 = vmatpush1.xpose.msra.mxu0 0.0
    %509 = vmatprep.subr.mxu0 0.0
    %510 = vmatpush1.xpose.msra.mxu0 0.0
    %511 = vmatprep.subr.mxu0 0.0
    %512 = vmatpush1.xpose.msra.mxu0 0.0
    %513 = vmatprep.subr.mxu0 0.0
    %514 = vmatpush1.xpose.msra.mxu0 0.0
    %515 = vmatprep.subr.mxu0 0.0
    %516 = vmatpush1.xpose.msra.mxu0 0.0
    %517 = vmatprep.subr.mxu0 0.0
    %518 = vmatpush1.xpose.msra.mxu0 0.0
    %519 = vmatprep.subr.mxu0 0.0
    %520 = vmatpush1.xpose.msra.mxu0 0.0
    %521 = vmatprep.subr.mxu0 0.0
    %522 = vmatpush1.xpose.msra.mxu0 0.0
    %523 = vmatprep.subr.mxu0 0.0
    %524 = vmatpush1.xpose.msra.mxu0 0.0
    %525 = vmatprep.subr.mxu0 0.0
    %526 = vmatpush1.xpose.msra.mxu0 0.0
    %527 = vmatprep.subr.mxu0 0.0
    %528 = vmatpush1.xpose.msra.mxu0 0.0
    %529 = vmatprep.subr.mxu0 0.0
    %530 = vmatpush1.xpose.msra.mxu0 0.0
    %531 = vmatprep.subr.mxu0 0.0
    %532 = vmatpush1.xpose.msra.mxu0 0.0
    %533 = vmatprep.subr.mxu0 0.0
    %534 = vmatpush1.xpose.msra.mxu0 0.0
    %535 = vmatprep.subr.mxu0 0.0
    %536 = vmatpush1.xpose.msra.mxu0 0.0
    %537 = vmatprep.subr.mxu0 0.0
    %538 = vmatpush1.xpose.msra.mxu0 0.0
    %539 = vmatprep.subr.mxu0 0.0
    %540 = vmatpush1.xpose.msra.mxu0 0.0
    %541 = vmatprep.subr.mxu0 0.0
    %542 = vmatpush1.xpose.msra.mxu0 0.0
    %543 = vmatprep.subr.mxu0 0.0
    %544 = vmatpush1.xpose.msra.mxu0 0.0
    %545 = vmatprep.subr.mxu0 0.0
    %546 = vmatpush1.xpose.msra.mxu0 0.0
    %547 = vmatprep.subr.mxu0 0.0
    %548 = vmatpush1.xpose.msra.mxu0 0.0
    %549 = vmatprep.subr.mxu0 0.0
    %550 = vmatpush1.xpose.msra.mxu0 0.0
    %551 = vmatprep.subr.mxu0 0.0
    %552 = vmatpush1.xpose.msra.mxu0 0.0
    %553 = vmatprep.subr.mxu0 0.0
    %554 = vmatpush1.xpose.msra.mxu0 0.0
    %555 = vmatprep.subr.mxu0 0.0
    %556 = vmatpush1.xpose.msra.mxu0 0.0
    %557 = vmatprep.mubr.f32.mxu0 0.0
    %558 = vmatmul.mubr.f32.gmra.mrb[0].mxu0 %v489
    %v559 = vpop.f32.mrb[0].mxu0
    %v560 = vadd.f32 %v233, %v559
    %v561 = vpop.f32.mrb[0].mxu0
    %562 = vdwg.mxu0
    %563 = vrot.lane.b32.xlu0 %v195, 96
    %v564 = vpop.permute.xlu0 %563
    %v565 = vsel %vm260, %v195, 0
    %v567 = vsel %vm260, %v564, 0
    %569 = vmatprep.subr.mxu0 0.0
    %570 = vmatpush1.xpose.msra.mxu0 %v567
    %571 = vmatprep.subr.mxu0 0.0
    %572 = vmatpush1.xpose.msra.mxu0 0.0
    %573 = vmatprep.subr.mxu0 0.0
    %574 = vmatpush1.xpose.msra.mxu0 0.0
    %575 = vmatprep.subr.mxu0 0.0
    %576 = vmatpush1.xpose.msra.mxu0 0.0
    %577 = vmatprep.subr.mxu0 0.0
    %578 = vmatpush1.xpose.msra.mxu0 0.0
    %579 = vmatprep.subr.mxu0 0.0
    %580 = vmatpush1.xpose.msra.mxu0 0.0
    %581 = vmatprep.subr.mxu0 0.0
    %582 = vmatpush1.xpose.msra.mxu0 0.0
    %583 = vmatprep.subr.mxu0 0.0
    %584 = vmatpush1.xpose.msra.mxu0 0.0
    %585 = vmatprep.subr.mxu0 0.0
    %586 = vmatpush1.xpose.msra.mxu0 0.0
    %587 = vmatprep.subr.mxu0 0.0
    %588 = vmatpush1.xpose.msra.mxu0 0.0
    %589 = vmatprep.subr.mxu0 0.0
    %590 = vmatpush1.xpose.msra.mxu0 0.0
    %591 = vmatprep.subr.mxu0 0.0
    %592 = vmatpush1.xpose.msra.mxu0 0.0
    %593 = vmatprep.subr.mxu0 0.0
    %594 = vmatpush1.xpose.msra.mxu0 0.0
    %595 = vmatprep.subr.mxu0 0.0
    %596 = vmatpush1.xpose.msra.mxu0 0.0
    %597 = vmatprep.subr.mxu0 0.0
    %598 = vmatpush1.xpose.msra.mxu0 0.0
    %599 = vmatprep.subr.mxu0 0.0
    %600 = vmatpush1.xpose.msra.mxu0 0.0
    %601 = vmatprep.subr.mxu0 0.0
    %602 = vmatpush1.xpose.msra.mxu0 0.0
    %603 = vmatprep.subr.mxu0 0.0
    %604 = vmatpush1.xpose.msra.mxu0 0.0
    %605 = vmatprep.subr.mxu0 0.0
    %606 = vmatpush1.xpose.msra.mxu0 0.0
    %607 = vmatprep.subr.mxu0 0.0
    %608 = vmatpush1.xpose.msra.mxu0 0.0
    %609 = vmatprep.subr.mxu0 0.0
    %610 = vmatpush1.xpose.msra.mxu0 0.0
    %611 = vmatprep.subr.mxu0 0.0
    %612 = vmatpush1.xpose.msra.mxu0 0.0
    %613 = vmatprep.subr.mxu0 0.0
    %614 = vmatpush1.xpose.msra.mxu0 0.0
    %615 = vmatprep.subr.mxu0 0.0
    %616 = vmatpush1.xpose.msra.mxu0 0.0
    %617 = vmatprep.subr.mxu0 0.0
    %618 = vmatpush1.xpose.msra.mxu0 0.0
    %619 = vmatprep.subr.mxu0 0.0
    %620 = vmatpush1.xpose.msra.mxu0 0.0
    %621 = vmatprep.subr.mxu0 0.0
    %622 = vmatpush1.xpose.msra.mxu0 0.0
    %623 = vmatprep.subr.mxu0 0.0
    %624 = vmatpush1.xpose.msra.mxu0 0.0
    %625 = vmatprep.subr.mxu0 0.0
    %626 = vmatpush1.xpose.msra.mxu0 0.0
    %627 = vmatprep.subr.mxu0 0.0
    %628 = vmatpush1.xpose.msra.mxu0 0.0
    %629 = vmatprep.subr.mxu0 0.0
    %630 = vmatpush1.xpose.msra.mxu0 0.0
    %631 = vmatprep.subr.mxu0 0.0
    %632 = vmatpush1.xpose.msra.mxu0 0.0
    %633 = vmatprep.mubr.f32.mxu0 0.0
    %634 = vmatmul.mubr.f32.gmra.mrb[0].mxu0 %v565
    %v635 = vpop.f32.mrb[0].mxu0
    %v636 = vadd.f32 %v237, %v635
    %v637 = vpop.f32.mrb[0].mxu0
    %638 = vdwg.mxu0
    %639 = vrot.lane.b32.xlu0 %v197, 96
    %v640 = vpop.permute.xlu0 %639
    %v641 = vsel %vm260, %v197, 0
    %v643 = vsel %vm260, %v640, 0
    %645 = vmatprep.subr.mxu0 0.0
    %646 = vmatpush1.xpose.msra.mxu0 %v643
    %647 = vmatprep.subr.mxu0 0.0
    %648 = vmatpush1.xpose.msra.mxu0 0.0
    %649 = vmatprep.subr.mxu0 0.0
    %650 = vmatpush1.xpose.msra.mxu0 0.0
    %651 = vmatprep.subr.mxu0 0.0
    %652 = vmatpush1.xpose.msra.mxu0 0.0
    %653 = vmatprep.subr.mxu0 0.0
    %654 = vmatpush1.xpose.msra.mxu0 0.0
    %655 = vmatprep.subr.mxu0 0.0
    %656 = vmatpush1.xpose.msra.mxu0 0.0
    %657 = vmatprep.subr.mxu0 0.0
    %658 = vmatpush1.xpose.msra.mxu0 0.0
    %659 = vmatprep.subr.mxu0 0.0
    %660 = vmatpush1.xpose.msra.mxu0 0.0
    %661 = vmatprep.subr.mxu0 0.0
    %662 = vmatpush1.xpose.msra.mxu0 0.0
    %663 = vmatprep.subr.mxu0 0.0
    %664 = vmatpush1.xpose.msra.mxu0 0.0
    %665 = vmatprep.subr.mxu0 0.0
    %666 = vmatpush1.xpose.msra.mxu0 0.0
    %667 = vmatprep.subr.mxu0 0.0
    %668 = vmatpush1.xpose.msra.mxu0 0.0
    %669 = vmatprep.subr.mxu0 0.0
    %670 = vmatpush1.xpose.msra.mxu0 0.0
    %671 = vmatprep.subr.mxu0 0.0
    %672 = vmatpush1.xpose.msra.mxu0 0.0
    %673 = vmatprep.subr.mxu0 0.0
    %674 = vmatpush1.xpose.msra.mxu0 0.0
    %675 = vmatprep.subr.mxu0 0.0
    %676 = vmatpush1.xpose.msra.mxu0 0.0
    %677 = vmatprep.subr.mxu0 0.0
    %678 = vmatpush1.xpose.msra.mxu0 0.0
    %679 = vmatprep.subr.mxu0 0.0
    %680 = vmatpush1.xpose.msra.mxu0 0.0
    %681 = vmatprep.subr.mxu0 0.0
    %682 = vmatpush1.xpose.msra.mxu0 0.0
    %683 = vmatprep.subr.mxu0 0.0
    %684 = vmatpush1.xpose.msra.mxu0 0.0
    %685 = vmatprep.subr.mxu0 0.0
    %686 = vmatpush1.xpose.msra.mxu0 0.0
    %687 = vmatprep.subr.mxu0 0.0
    %688 = vmatpush1.xpose.msra.mxu0 0.0
    %689 = vmatprep.subr.mxu0 0.0
    %690 = vmatpush1.xpose.msra.mxu0 0.0
    %691 = vmatprep.subr.mxu0 0.0
    %692 = vmatpush1.xpose.msra.mxu0 0.0
    %693 = vmatprep.subr.mxu0 0.0
    %694 = vmatpush1.xpose.msra.mxu0 0.0
    %695 = vmatprep.subr.mxu0 0.0
    %696 = vmatpush1.xpose.msra.mxu0 0.0
    %697 = vmatprep.subr.mxu0 0.0
    %698 = vmatpush1.xpose.msra.mxu0 0.0
    %699 = vmatprep.subr.mxu0 0.0
    %700 = vmatpush1.xpose.msra.mxu0 0.0
    %701 = vmatprep.subr.mxu0 0.0
    %702 = vmatpush1.xpose.msra.mxu0 0.0
    %703 = vmatprep.subr.mxu0 0.0
    %704 = vmatpush1.xpose.msra.mxu0 0.0
    %705 = vmatprep.subr.mxu0 0.0
    %706 = vmatpush1.xpose.msra.mxu0 0.0
    %707 = vmatprep.subr.mxu0 0.0
    %708 = vmatpush1.xpose.msra.mxu0 0.0
    %709 = vmatprep.mubr.f32.mxu0 0.0
    %710 = vmatmul.mubr.f32.gmra.mrb[0].mxu0 %v641
    %v711 = vpop.f32.mrb[0].mxu0
    %v712 = vadd.f32 %v241, %v711
    %v713 = vpop.f32.mrb[0].mxu0
    %714 = vdwg.mxu0
    %715 = vrot.lane.b32.xlu0 %v199, 96
    %v716 = vpop.permute.xlu0 %715
    %v717 = vsel %vm260, %v199, 0
    %v719 = vsel %vm260, %v716, 0
    %721 = vmatprep.subr.mxu0 0.0
    %722 = vmatpush1.xpose.msra.mxu0 %v719
    %723 = vmatprep.subr.mxu0 0.0
    %724 = vmatpush1.xpose.msra.mxu0 0.0
    %725 = vmatprep.subr.mxu0 0.0
    %726 = vmatpush1.xpose.msra.mxu0 0.0
    %727 = vmatprep.subr.mxu0 0.0
    %728 = vmatpush1.xpose.msra.mxu0 0.0
    %729 = vmatprep.subr.mxu0 0.0
    %730 = vmatpush1.xpose.msra.mxu0 0.0
    %731 = vmatprep.subr.mxu0 0.0
    %732 = vmatpush1.xpose.msra.mxu0 0.0
    %733 = vmatprep.subr.mxu0 0.0
    %734 = vmatpush1.xpose.msra.mxu0 0.0
    %735 = vmatprep.subr.mxu0 0.0
    %736 = vmatpush1.xpose.msra.mxu0 0.0
    %737 = vmatprep.subr.mxu0 0.0
    %738 = vmatpush1.xpose.msra.mxu0 0.0
    %739 = vmatprep.subr.mxu0 0.0
    %740 = vmatpush1.xpose.msra.mxu0 0.0
    %741 = vmatprep.subr.mxu0 0.0
    %742 = vmatpush1.xpose.msra.mxu0 0.0
    %743 = vmatprep.subr.mxu0 0.0
    %744 = vmatpush1.xpose.msra.mxu0 0.0
    %745 = vmatprep.subr.mxu0 0.0
    %746 = vmatpush1.xpose.msra.mxu0 0.0
    %747 = vmatprep.subr.mxu0 0.0
    %748 = vmatpush1.xpose.msra.mxu0 0.0
    %749 = vmatprep.subr.mxu0 0.0
    %750 = vmatpush1.xpose.msra.mxu0 0.0
    %751 = vmatprep.subr.mxu0 0.0
    %752 = vmatpush1.xpose.msra.mxu0 0.0
    %753 = vmatprep.subr.mxu0 0.0
    %754 = vmatpush1.xpose.msra.mxu0 0.0
    %755 = vmatprep.subr.mxu0 0.0
    %756 = vmatpush1.xpose.msra.mxu0 0.0
    %757 = vmatprep.subr.mxu0 0.0
    %758 = vmatpush1.xpose.msra.mxu0 0.0
    %759 = vmatprep.subr.mxu0 0.0
    %760 = vmatpush1.xpose.msra.mxu0 0.0
    %761 = vmatprep.subr.mxu0 0.0
    %762 = vmatpush1.xpose.msra.mxu0 0.0
    %763 = vmatprep.subr.mxu0 0.0
    %764 = vmatpush1.xpose.msra.mxu0 0.0
    %765 = vmatprep.subr.mxu0 0.0
    %766 = vmatpush1.xpose.msra.mxu0 0.0
    %767 = vmatprep.subr.mxu0 0.0
    %768 = vmatpush1.xpose.msra.mxu0 0.0
    %769 = vmatprep.subr.mxu0 0.0
    %770 = vmatpush1.xpose.msra.mxu0 0.0
    %771 = vmatprep.subr.mxu0 0.0
    %772 = vmatpush1.xpose.msra.mxu0 0.0
    %773 = vmatprep.subr.mxu0 0.0
    %774 = vmatpush1.xpose.msra.mxu0 0.0
    %775 = vmatprep.subr.mxu0 0.0
    %776 = vmatpush1.xpose.msra.mxu0 0.0
    %777 = vmatprep.subr.mxu0 0.0
    %778 = vmatpush1.xpose.msra.mxu0 0.0
    %779 = vmatprep.subr.mxu0 0.0
    %780 = vmatpush1.xpose.msra.mxu0 0.0
    %781 = vmatprep.subr.mxu0 0.0
    %782 = vmatpush1.xpose.msra.mxu0 0.0
    %783 = vmatprep.subr.mxu0 0.0
    %784 = vmatpush1.xpose.msra.mxu0 0.0
    %785 = vmatprep.mubr.f32.mxu0 0.0
    %786 = vmatmul.mubr.f32.gmra.mrb[0].mxu0 %v717
    %v787 = vpop.f32.mrb[0].mxu0
    %v788 = vadd.f32 %v245, %v787
    %v789 = vpop.f32.mrb[0].mxu0
    %790 = vdwg.mxu0
    %791 = vrot.lane.b32.xlu0 %v201, 96
    %v792 = vpop.permute.xlu0 %791
    %v793 = vsel %vm260, %v201, 0
    %v795 = vsel %vm260, %v792, 0
    %797 = vmatprep.subr.mxu0 0.0
    %798 = vmatpush1.xpose.msra.mxu0 %v795
    %799 = vmatprep.subr.mxu0 0.0
    %800 = vmatpush1.xpose.msra.mxu0 0.0
    %801 = vmatprep.subr.mxu0 0.0
    %802 = vmatpush1.xpose.msra.mxu0 0.0
    %803 = vmatprep.subr.mxu0 0.0
    %804 = vmatpush1.xpose.msra.mxu0 0.0
    %805 = vmatprep.subr.mxu0 0.0
    %806 = vmatpush1.xpose.msra.mxu0 0.0
    %807 = vmatprep.subr.mxu0 0.0
    %808 = vmatpush1.xpose.msra.mxu0 0.0
    %809 = vmatprep.subr.mxu0 0.0
    %810 = vmatpush1.xpose.msra.mxu0 0.0
    %811 = vmatprep.subr.mxu0 0.0
    %812 = vmatpush1.xpose.msra.mxu0 0.0
    %813 = vmatprep.subr.mxu0 0.0
    %814 = vmatpush1.xpose.msra.mxu0 0.0
    %815 = vmatprep.subr.mxu0 0.0
    %816 = vmatpush1.xpose.msra.mxu0 0.0
    %817 = vmatprep.subr.mxu0 0.0
    %818 = vmatpush1.xpose.msra.mxu0 0.0
    %819 = vmatprep.subr.mxu0 0.0
    %820 = vmatpush1.xpose.msra.mxu0 0.0
    %821 = vmatprep.subr.mxu0 0.0
    %822 = vmatpush1.xpose.msra.mxu0 0.0
    %823 = vmatprep.subr.mxu0 0.0
    %824 = vmatpush1.xpose.msra.mxu0 0.0
    %825 = vmatprep.subr.mxu0 0.0
    %826 = vmatpush1.xpose.msra.mxu0 0.0
    %827 = vmatprep.subr.mxu0 0.0
    %828 = vmatpush1.xpose.msra.mxu0 0.0
    %829 = vmatprep.subr.mxu0 0.0
    %830 = vmatpush1.xpose.msra.mxu0 0.0
    %831 = vmatprep.subr.mxu0 0.0
    %832 = vmatpush1.xpose.msra.mxu0 0.0
    %833 = vmatprep.subr.mxu0 0.0
    %834 = vmatpush1.xpose.msra.mxu0 0.0
    %835 = vmatprep.subr.mxu0 0.0
    %836 = vmatpush1.xpose.msra.mxu0 0.0
    %837 = vmatprep.subr.mxu0 0.0
    %838 = vmatpush1.xpose.msra.mxu0 0.0
    %839 = vmatprep.subr.mxu0 0.0
    %840 = vmatpush1.xpose.msra.mxu0 0.0
    %841 = vmatprep.subr.mxu0 0.0
    %842 = vmatpush1.xpose.msra.mxu0 0.0
    %843 = vmatprep.subr.mxu0 0.0
    %844 = vmatpush1.xpose.msra.mxu0 0.0
    %845 = vmatprep.subr.mxu0 0.0
    %846 = vmatpush1.xpose.msra.mxu0 0.0
    %847 = vmatprep.subr.mxu0 0.0
    %848 = vmatpush1.xpose.msra.mxu0 0.0
    %849 = vmatprep.subr.mxu0 0.0
    %850 = vmatpush1.xpose.msra.mxu0 0.0
    %851 = vmatprep.subr.mxu0 0.0
    %852 = vmatpush1.xpose.msra.mxu0 0.0
    %853 = vmatprep.subr.mxu0 0.0
    %854 = vmatpush1.xpose.msra.mxu0 0.0
    %855 = vmatprep.subr.mxu0 0.0
    %856 = vmatpush1.xpose.msra.mxu0 0.0
    %857 = vmatprep.subr.mxu0 0.0
    %858 = vmatpush1.xpose.msra.mxu0 0.0
    %859 = vmatprep.subr.mxu0 0.0
    %860 = vmatpush1.xpose.msra.mxu0 0.0
    %861 = vmatprep.mubr.f32.mxu0 0.0
    %862 = vmatmul.mubr.f32.gmra.mrb[0].mxu0 %v793
    %v863 = vpop.f32.mrb[0].mxu0
    %v864 = vadd.f32 %v249, %v863
    %v865 = vpop.f32.mrb[0].mxu0
    %866 = vdwg.mxu0
    %v867 = vsel %vm260, %v332, -inf
    %868 = vmax.xlane.f32.xlu0 %v867
    %v869 = vpop.xlane.xlu0 %868
    %v870 = vsel %vm260, %v408, -inf
    %871 = vmax.xlane.f32.xlu0 %v870
    %v872 = vpop.xlane.xlu0 %871
    %v873 = vsel %vm260, %v484, -inf
    %874 = vmax.xlane.f32.xlu0 %v873
    %v875 = vpop.xlane.xlu0 %874
    %v876 = vsel %vm260, %v560, -inf
    %877 = vmax.xlane.f32.xlu0 %v876
    %v878 = vpop.xlane.xlu0 %877
    %v879 = vsel %vm260, %v636, -inf
    %880 = vmax.xlane.f32.xlu0 %v879
    %v881 = vpop.xlane.xlu0 %880
    %v882 = vsel %vm260, %v712, -inf
    %883 = vmax.xlane.f32.xlu0 %v882
    %v884 = vpop.xlane.xlu0 %883
    %v885 = vsel %vm260, %v788, -inf
    %886 = vmax.xlane.f32.xlu0 %v885
    %v887 = vpop.xlane.xlu0 %886
    %v888 = vsel %vm260, %v864, -inf
    %889 = vmax.xlane.f32.xlu0 %v888
    %v890 = vpop.xlane.xlu0 %889
    %v891 = vsub.f32 %v332, %v869
    %v892 = vsub.f32 %v408, %v872
    %v893 = vsub.f32 %v484, %v875
    %v894 = vsub.f32 %v560, %v878
    %v895 = vsub.f32 %v636, %v881
    %v896 = vsub.f32 %v712, %v884
    %v897 = vsub.f32 %v788, %v887
    %v898 = vsub.f32 %v864, %v890
    %v899 = vmul.f32 %v891, 1.442695
    %v900 = vpow.pop %v899
    %v901 = vmul.f32 %v892, 1.442695
    %v902 = vpow.pop %v901
    %v903 = vmul.f32 %v893, 1.442695
    %v904 = vpow.pop %v903
    %v905 = vmul.f32 %v894, 1.442695
    %v906 = vpow.pop %v905
    %v907 = vmul.f32 %v895, 1.442695
    %v908 = vpow.pop %v907
    %v909 = vmul.f32 %v896, 1.442695
    %v910 = vpow.pop %v909
    %v911 = vmul.f32 %v897, 1.442695
    %v912 = vpow.pop %v911
    %v913 = vmul.f32 %v898, 1.442695
    %v914 = vpow.pop %v913
    %v915 = vsel %vm260, %v900, 0.0
    %916 = vadd.xlane.f32.xlu0 %v915
    %v917 = vpop.xlane.xlu0 %916
    %v918 = vsel %vm260, %v902, 0.0
    %919 = vadd.xlane.f32.xlu0 %v918
    %v920 = vpop.xlane.xlu0 %919
    %v921 = vsel %vm260, %v904, 0.0
    %922 = vadd.xlane.f32.xlu0 %v921
    %v923 = vpop.xlane.xlu0 %922
    %v924 = vsel %vm260, %v906, 0.0
    %925 = vadd.xlane.f32.xlu0 %v924
    %v926 = vpop.xlane.xlu0 %925
    %v927 = vsel %vm260, %v908, 0.0
    %928 = vadd.xlane.f32.xlu0 %v927
    %v929 = vpop.xlane.xlu0 %928
    %v930 = vsel %vm260, %v910, 0.0
    %931 = vadd.xlane.f32.xlu0 %v930
    %v932 = vpop.xlane.xlu0 %931
    %v933 = vsel %vm260, %v912, 0.0
    %934 = vadd.xlane.f32.xlu0 %v933
    %v935 = vpop.xlane.xlu0 %934
    %v936 = vsel %vm260, %v914, 0.0
    %937 = vadd.xlane.f32.xlu0 %v936
    %v938 = vpop.xlane.xlu0 %937
    %v939 = vrcp.pop %v917
    %v940 = vrcp.pop %v920
    %v941 = vrcp.pop %v923
    %v942 = vrcp.pop %v926
    %v943 = vrcp.pop %v929
    %v944 = vrcp.pop %v932
    %v945 = vrcp.pop %v935
    %v946 = vrcp.pop %v938
    %v947 = vmul.f32 %v900, %v939
    %v948 = vmul.f32 %v902, %v940
    %v949 = vmul.f32 %v904, %v941
    %v950 = vmul.f32 %v906, %v942
    %v951 = vmul.f32 %v908, %v943
    %v952 = vmul.f32 %v910, %v944
    %v953 = vmul.f32 %v912, %v945
    %v954 = vmul.f32 %v914, %v946
    %955 = vrot.lane.b32.xlu0 %v180, 64
    %v956 = vpop.permute.xlu0 %955
    %v959 = vsel %vm260, %v947, 0
    %961 = vmatprep.subr.mxu0 0.0
    %962 = vmatpush1.msra.mxu0 %v956
    %963 = vmatprep.subr.mxu0 0.0
    %964 = vmatpush1.msra.mxu0 0.0
    %965 = vmatprep.subr.mxu0 0.0
    %966 = vmatpush1.msra.mxu0 0.0
    %967 = vmatprep.subr.mxu0 0.0
    %968 = vmatpush1.msra.mxu0 0.0
    %969 = vmatprep.subr.mxu0 0.0
    %970 = vmatpush1.msra.mxu0 0.0
    %971 = vmatprep.subr.mxu0 0.0
    %972 = vmatpush1.msra.mxu0 0.0
    %973 = vmatprep.subr.mxu0 0.0
    %974 = vmatpush1.msra.mxu0 0.0
    %975 = vmatprep.subr.mxu0 0.0
    %976 = vmatpush1.msra.mxu0 0.0
    %977 = vmatprep.subr.mxu0 0.0
    %978 = vmatpush1.msra.mxu0 0.0
    %979 = vmatprep.subr.mxu0 0.0
    %980 = vmatpush1.msra.mxu0 0.0
    %981 = vmatprep.subr.mxu0 0.0
    %982 = vmatpush1.msra.mxu0 0.0
    %983 = vmatprep.subr.mxu0 0.0
    %984 = vmatpush1.msra.mxu0 0.0
    %985 = vmatprep.subr.mxu0 0.0
    %986 = vmatpush1.msra.mxu0 0.0
    %987 = vmatprep.subr.mxu0 0.0
    %988 = vmatpush1.msra.mxu0 0.0
    %989 = vmatprep.subr.mxu0 0.0
    %990 = vmatpush1.msra.mxu0 0.0
    %991 = vmatprep.subr.mxu0 0.0
    %992 = vmatpush1.msra.mxu0 0.0
    %993 = vmatprep.subr.mxu0 0.0
    %994 = vmatpush1.msra.mxu0 0.0
    %995 = vmatprep.subr.mxu0 0.0
    %996 = vmatpush1.msra.mxu0 0.0
    %997 = vmatprep.subr.mxu0 0.0
    %998 = vmatpush1.msra.mxu0 0.0
    %999 = vmatprep.subr.mxu0 0.0
    %1000 = vmatpush1.msra.mxu0 0.0
    %1001 = vmatprep.subr.mxu0 0.0
    %1002 = vmatpush1.msra.mxu0 0.0
    %1003 = vmatprep.subr.mxu0 0.0
    %1004 = vmatpush1.msra.mxu0 0.0
    %1005 = vmatprep.subr.mxu0 0.0
    %1006 = vmatpush1.msra.mxu0 0.0
    %1007 = vmatprep.subr.mxu0 0.0
    %1008 = vmatpush1.msra.mxu0 0.0
    %1009 = vmatprep.subr.mxu0 0.0
    %1010 = vmatpush1.msra.mxu0 0.0
    %1011 = vmatprep.subr.mxu0 0.0
    %1012 = vmatpush1.msra.mxu0 0.0
    %1013 = vmatprep.subr.mxu0 0.0
    %1014 = vmatpush1.msra.mxu0 0.0
    %1015 = vmatprep.subr.mxu0 0.0
    %1016 = vmatpush1.msra.mxu0 0.0
    %1017 = vmatprep.subr.mxu0 0.0
    %1018 = vmatpush1.msra.mxu0 0.0
    %1019 = vmatprep.subr.mxu0 0.0
    %1020 = vmatpush1.msra.mxu0 0.0
    %1021 = vmatprep.subr.mxu0 0.0
    %1022 = vmatpush1.msra.mxu0 0.0
    %1023 = vmatprep.subr.mxu0 0.0
    %1024 = vmatpush1.msra.mxu0 0.0
    %1025 = vmatprep.mubr.f32.mxu0 0.0
    %1026 = vmatmul.mubr.f32.gmra.mrb[0].mxu0 %v959
    %v1027 = vpop.f32.mrb[0].mxu0
    %v1028 = vadd.f32 0.0, %v1027
    %v1029 = vpop.f32.mrb[0].mxu0
    %1030 = vdwg.mxu0
    %1031 = vrot.lane.b32.xlu0 %v185, 64
    %v1032 = vpop.permute.xlu0 %1031
    %v1035 = vsel %vm260, %v948, 0
    %1037 = vmatprep.subr.mxu0 0.0
    %1038 = vmatpush1.msra.mxu0 %v1032
    %1039 = vmatprep.subr.mxu0 0.0
    %1040 = vmatpush1.msra.mxu0 0.0
    %1041 = vmatprep.subr.mxu0 0.0
    %1042 = vmatpush1.msra.mxu0 0.0
    %1043 = vmatprep.subr.mxu0 0.0
    %1044 = vmatpush1.msra.mxu0 0.0
    %1045 = vmatprep.subr.mxu0 0.0
    %1046 = vmatpush1.msra.mxu0 0.0
    %1047 = vmatprep.subr.mxu0 0.0
    %1048 = vmatpush1.msra.mxu0 0.0
    %1049 = vmatprep.subr.mxu0 0.0
    %1050 = vmatpush1.msra.mxu0 0.0
    %1051 = vmatprep.subr.mxu0 0.0
    %1052 = vmatpush1.msra.mxu0 0.0
    %1053 = vmatprep.subr.mxu0 0.0
    %1054 = vmatpush1.msra.mxu0 0.0
    %1055 = vmatprep.subr.mxu0 0.0
    %1056 = vmatpush1.msra.mxu0 0.0
    %1057 = vmatprep.subr.mxu0 0.0
    %1058 = vmatpush1.msra.mxu0 0.0
    %1059 = vmatprep.subr.mxu0 0.0
    %1060 = vmatpush1.msra.mxu0 0.0
    %1061 = vmatprep.subr.mxu0 0.0
    %1062 = vmatpush1.msra.mxu0 0.0
    %1063 = vmatprep.subr.mxu0 0.0
    %1064 = vmatpush1.msra.mxu0 0.0
    %1065 = vmatprep.subr.mxu0 0.0
    %1066 = vmatpush1.msra.mxu0 0.0
    %1067 = vmatprep.subr.mxu0 0.0
    %1068 = vmatpush1.msra.mxu0 0.0
    %1069 = vmatprep.subr.mxu0 0.0
    %1070 = vmatpush1.msra.mxu0 0.0
    %1071 = vmatprep.subr.mxu0 0.0
    %1072 = vmatpush1.msra.mxu0 0.0
    %1073 = vmatprep.subr.mxu0 0.0
    %1074 = vmatpush1.msra.mxu0 0.0
    %1075 = vmatprep.subr.mxu0 0.0
    %1076 = vmatpush1.msra.mxu0 0.0
    %1077 = vmatprep.subr.mxu0 0.0
    %1078 = vmatpush1.msra.mxu0 0.0
    %1079 = vmatprep.subr.mxu0 0.0
    %1080 = vmatpush1.msra.mxu0 0.0
    %1081 = vmatprep.subr.mxu0 0.0
    %1082 = vmatpush1.msra.mxu0 0.0
    %1083 = vmatprep.subr.mxu0 0.0
    %1084 = vmatpush1.msra.mxu0 0.0
    %1085 = vmatprep.subr.mxu0 0.0
    %1086 = vmatpush1.msra.mxu0 0.0
    %1087 = vmatprep.subr.mxu0 0.0
    %1088 = vmatpush1.msra.mxu0 0.0
    %1089 = vmatprep.subr.mxu0 0.0
    %1090 = vmatpush1.msra.mxu0 0.0
    %1091 = vmatprep.subr.mxu0 0.0
    %1092 = vmatpush1.msra.mxu0 0.0
    %1093 = vmatprep.subr.mxu0 0.0
    %1094 = vmatpush1.msra.mxu0 0.0
    %1095 = vmatprep.subr.mxu0 0.0
    %1096 = vmatpush1.msra.mxu0 0.0
    %1097 = vmatprep.subr.mxu0 0.0
    %1098 = vmatpush1.msra.mxu0 0.0
    %1099 = vmatprep.subr.mxu0 0.0
    %1100 = vmatpush1.msra.mxu0 0.0
    %1101 = vmatprep.mubr.f32.mxu0 0.0
    %1102 = vmatmul.mubr.f32.gmra.mrb[0].mxu0 %v1035
    %v1103 = vpop.f32.mrb[0].mxu0
    %v1104 = vadd.f32 0.0, %v1103
    %v1105 = vpop.f32.mrb[0].mxu0
    %1106 = vdwg.mxu0
    %1107 = vrot.lane.b32.xlu0 %v191, 64
    %v1108 = vpop.permute.xlu0 %1107
    %v1111 = vsel %vm260, %v949, 0
    %1113 = vmatprep.subr.mxu0 0.0
    %1114 = vmatpush1.msra.mxu0 %v1108
    %1115 = vmatprep.subr.mxu0 0.0
    %1116 = vmatpush1.msra.mxu0 0.0
    %1117 = vmatprep.subr.mxu0 0.0
    %1118 = vmatpush1.msra.mxu0 0.0
    %1119 = vmatprep.subr.mxu0 0.0
    %1120 = vmatpush1.msra.mxu0 0.0
    %1121 = vmatprep.subr.mxu0 0.0
    %1122 = vmatpush1.msra.mxu0 0.0
    %1123 = vmatprep.subr.mxu0 0.0
    %1124 = vmatpush1.msra.mxu0 0.0
    %1125 = vmatprep.subr.mxu0 0.0
    %1126 = vmatpush1.msra.mxu0 0.0
    %1127 = vmatprep.subr.mxu0 0.0
    %1128 = vmatpush1.msra.mxu0 0.0
    %1129 = vmatprep.subr.mxu0 0.0
    %1130 = vmatpush1.msra.mxu0 0.0
    %1131 = vmatprep.subr.mxu0 0.0
    %1132 = vmatpush1.msra.mxu0 0.0
    %1133 = vmatprep.subr.mxu0 0.0
    %1134 = vmatpush1.msra.mxu0 0.0
    %1135 = vmatprep.subr.mxu0 0.0
    %1136 = vmatpush1.msra.mxu0 0.0
    %1137 = vmatprep.subr.mxu0 0.0
    %1138 = vmatpush1.msra.mxu0 0.0
    %1139 = vmatprep.subr.mxu0 0.0
    %1140 = vmatpush1.msra.mxu0 0.0
    %1141 = vmatprep.subr.mxu0 0.0
    %1142 = vmatpush1.msra.mxu0 0.0
    %1143 = vmatprep.subr.mxu0 0.0
    %1144 = vmatpush1.msra.mxu0 0.0
    %1145 = vmatprep.subr.mxu0 0.0
    %1146 = vmatpush1.msra.mxu0 0.0
    %1147 = vmatprep.subr.mxu0 0.0
    %1148 = vmatpush1.msra.mxu0 0.0
    %1149 = vmatprep.subr.mxu0 0.0
    %1150 = vmatpush1.msra.mxu0 0.0
    %1151 = vmatprep.subr.mxu0 0.0
    %1152 = vmatpush1.msra.mxu0 0.0
    %1153 = vmatprep.subr.mxu0 0.0
    %1154 = vmatpush1.msra.mxu0 0.0
    %1155 = vmatprep.subr.mxu0 0.0
    %1156 = vmatpush1.msra.mxu0 0.0
    %1157 = vmatprep.subr.mxu0 0.0
    %1158 = vmatpush1.msra.mxu0 0.0
    %1159 = vmatprep.subr.mxu0 0.0
    %1160 = vmatpush1.msra.mxu0 0.0
    %1161 = vmatprep.subr.mxu0 0.0
    %1162 = vmatpush1.msra.mxu0 0.0
    %1163 = vmatprep.subr.mxu0 0.0
    %1164 = vmatpush1.msra.mxu0 0.0
    %1165 = vmatprep.subr.mxu0 0.0
    %1166 = vmatpush1.msra.mxu0 0.0
    %1167 = vmatprep.subr.mxu0 0.0
    %1168 = vmatpush1.msra.mxu0 0.0
    %1169 = vmatprep.subr.mxu0 0.0
    %1170 = vmatpush1.msra.mxu0 0.0
    %1171 = vmatprep.subr.mxu0 0.0
    %1172 = vmatpush1.msra.mxu0 0.0
    %1173 = vmatprep.subr.mxu0 0.0
    %1174 = vmatpush1.msra.mxu0 0.0
    %1175 = vmatprep.subr.mxu0 0.0
    %1176 = vmatpush1.msra.mxu0 0.0
    %1177 = vmatprep.mubr.f32.mxu0 0.0
    %1178 = vmatmul.mubr.f32.gmra.mrb[0].mxu0 %v1111
    %v1179 = vpop.f32.mrb[0].mxu0
    %v1180 = vadd.f32 0.0, %v1179
    %v1181 = vpop.f32.mrb[0].mxu0
    %1182 = vdwg.mxu0
    %1183 = vrot.lane.b32.xlu0 %v193, 64
    %v1184 = vpop.permute.xlu0 %1183
    %v1187 = vsel %vm260, %v950, 0
    %1189 = vmatprep.subr.mxu0 0.0
    %1190 = vmatpush1.msra.mxu0 %v1184
    %1191 = vmatprep.subr.mxu0 0.0
    %1192 = vmatpush1.msra.mxu0 0.0
    %1193 = vmatprep.subr.mxu0 0.0
    %1194 = vmatpush1.msra.mxu0 0.0
    %1195 = vmatprep.subr.mxu0 0.0
    %1196 = vmatpush1.msra.mxu0 0.0
    %1197 = vmatprep.subr.mxu0 0.0
    %1198 = vmatpush1.msra.mxu0 0.0
    %1199 = vmatprep.subr.mxu0 0.0
    %1200 = vmatpush1.msra.mxu0 0.0
    %1201 = vmatprep.subr.mxu0 0.0
    %1202 = vmatpush1.msra.mxu0 0.0
    %1203 = vmatprep.subr.mxu0 0.0
    %1204 = vmatpush1.msra.mxu0 0.0
    %1205 = vmatprep.subr.mxu0 0.0
    %1206 = vmatpush1.msra.mxu0 0.0
    %1207 = vmatprep.subr.mxu0 0.0
    %1208 = vmatpush1.msra.mxu0 0.0
    %1209 = vmatprep.subr.mxu0 0.0
    %1210 = vmatpush1.msra.mxu0 0.0
    %1211 = vmatprep.subr.mxu0 0.0
    %1212 = vmatpush1.msra.mxu0 0.0
    %1213 = vmatprep.subr.mxu0 0.0
    %1214 = vmatpush1.msra.mxu0 0.0
    %1215 = vmatprep.subr.mxu0 0.0
    %1216 = vmatpush1.msra.mxu0 0.0
    %1217 = vmatprep.subr.mxu0 0.0
    %1218 = vmatpush1.msra.mxu0 0.0
    %1219 = vmatprep.subr.mxu0 0.0
    %1220 = vmatpush1.msra.mxu0 0.0
    %1221 = vmatprep.subr.mxu0 0.0
    %1222 = vmatpush1.msra.mxu0 0.0
    %1223 = vmatprep.subr.mxu0 0.0
    %1224 = vmatpush1.msra.mxu0 0.0
    %1225 = vmatprep.subr.mxu0 0.0
    %1226 = vmatpush1.msra.mxu0 0.0
    %1227 = vmatprep.subr.mxu0 0.0
    %1228 = vmatpush1.msra.mxu0 0.0
    %1229 = vmatprep.subr.mxu0 0.0
    %1230 = vmatpush1.msra.mxu0 0.0
    %1231 = vmatprep.subr.mxu0 0.0
    %1232 = vmatpush1.msra.mxu0 0.0
    %1233 = vmatprep.subr.mxu0 0.0
    %1234 = vmatpush1.msra.mxu0 0.0
    %1235 = vmatprep.subr.mxu0 0.0
    %1236 = vmatpush1.msra.mxu0 0.0
    %1237 = vmatprep.subr.mxu0 0.0
    %1238 = vmatpush1.msra.mxu0 0.0
    %1239 = vmatprep.subr.mxu0 0.0
    %1240 = vmatpush1.msra.mxu0 0.0
    %1241 = vmatprep.subr.mxu0 0.0
    %1242 = vmatpush1.msra.mxu0 0.0
    %1243 = vmatprep.subr.mxu0 0.0
    %1244 = vmatpush1.msra.mxu0 0.0
    %1245 = vmatprep.subr.mxu0 0.0
    %1246 = vmatpush1.msra.mxu0 0.0
    %1247 = vmatprep.subr.mxu0 0.0
    %1248 = vmatpush1.msra.mxu0 0.0
    %1249 = vmatprep.subr.mxu0 0.0
    %1250 = vmatpush1.msra.mxu0 0.0
    %1251 = vmatprep.subr.mxu0 0.0
    %1252 = vmatpush1.msra.mxu0 0.0
    %1253 = vmatprep.mubr.f32.mxu0 0.0
    %1254 = vmatmul.mubr.f32.gmra.mrb[0].mxu0 %v1187
    %v1255 = vpop.f32.mrb[0].mxu0
    %v1256 = vadd.f32 0.0, %v1255
    %v1257 = vpop.f32.mrb[0].mxu0
    %1258 = vdwg.mxu0
    %1259 = vrot.lane.b32.xlu0 %v195, 64
    %v1260 = vpop.permute.xlu0 %1259
    %v1263 = vsel %vm260, %v951, 0
    %1265 = vmatprep.subr.mxu0 0.0
    %1266 = vmatpush1.msra.mxu0 %v1260
    %1267 = vmatprep.subr.mxu0 0.0
    %1268 = vmatpush1.msra.mxu0 0.0
    %1269 = vmatprep.subr.mxu0 0.0
    %1270 = vmatpush1.msra.mxu0 0.0
    %1271 = vmatprep.subr.mxu0 0.0
    %1272 = vmatpush1.msra.mxu0 0.0
    %1273 = vmatprep.subr.mxu0 0.0
    %1274 = vmatpush1.msra.mxu0 0.0
    %1275 = vmatprep.subr.mxu0 0.0
    %1276 = vmatpush1.msra.mxu0 0.0
    %1277 = vmatprep.subr.mxu0 0.0
    %1278 = vmatpush1.msra.mxu0 0.0
    %1279 = vmatprep.subr.mxu0 0.0
    %1280 = vmatpush1.msra.mxu0 0.0
    %1281 = vmatprep.subr.mxu0 0.0
    %1282 = vmatpush1.msra.mxu0 0.0
    %1283 = vmatprep.subr.mxu0 0.0
    %1284 = vmatpush1.msra.mxu0 0.0
    %1285 = vmatprep.subr.mxu0 0.0
    %1286 = vmatpush1.msra.mxu0 0.0
    %1287 = vmatprep.subr.mxu0 0.0
    %1288 = vmatpush1.msra.mxu0 0.0
    %1289 = vmatprep.subr.mxu0 0.0
    %1290 = vmatpush1.msra.mxu0 0.0
    %1291 = vmatprep.subr.mxu0 0.0
    %1292 = vmatpush1.msra.mxu0 0.0
    %1293 = vmatprep.subr.mxu0 0.0
    %1294 = vmatpush1.msra.mxu0 0.0
    %1295 = vmatprep.subr.mxu0 0.0
    %1296 = vmatpush1.msra.mxu0 0.0
    %1297 = vmatprep.subr.mxu0 0.0
    %1298 = vmatpush1.msra.mxu0 0.0
    %1299 = vmatprep.subr.mxu0 0.0
    %1300 = vmatpush1.msra.mxu0 0.0
    %1301 = vmatprep.subr.mxu0 0.0
    %1302 = vmatpush1.msra.mxu0 0.0
    %1303 = vmatprep.subr.mxu0 0.0
    %1304 = vmatpush1.msra.mxu0 0.0
    %1305 = vmatprep.subr.mxu0 0.0
    %1306 = vmatpush1.msra.mxu0 0.0
    %1307 = vmatprep.subr.mxu0 0.0
    %1308 = vmatpush1.msra.mxu0 0.0
    %1309 = vmatprep.subr.mxu0 0.0
    %1310 = vmatpush1.msra.mxu0 0.0
    %1311 = vmatprep.subr.mxu0 0.0
    %1312 = vmatpush1.msra.mxu0 0.0
    %1313 = vmatprep.subr.mxu0 0.0
    %1314 = vmatpush1.msra.mxu0 0.0
    %1315 = vmatprep.subr.mxu0 0.0
    %1316 = vmatpush1.msra.mxu0 0.0
    %1317 = vmatprep.subr.mxu0 0.0
    %1318 = vmatpush1.msra.mxu0 0.0
    %1319 = vmatprep.subr.mxu0 0.0
    %1320 = vmatpush1.msra.mxu0 0.0
    %1321 = vmatprep.subr.mxu0 0.0
    %1322 = vmatpush1.msra.mxu0 0.0
    %1323 = vmatprep.subr.mxu0 0.0
    %1324 = vmatpush1.msra.mxu0 0.0
    %1325 = vmatprep.subr.mxu0 0.0
    %1326 = vmatpush1.msra.mxu0 0.0
    %1327 = vmatprep.subr.mxu0 0.0
    %1328 = vmatpush1.msra.mxu0 0.0
    %1329 = vmatprep.mubr.f32.mxu0 0.0
    %1330 = vmatmul.mubr.f32.gmra.mrb[0].mxu0 %v1263
    %v1331 = vpop.f32.mrb[0].mxu0
    %v1332 = vadd.f32 0.0, %v1331
    %v1333 = vpop.f32.mrb[0].mxu0
    %1334 = vdwg.mxu0
    %1335 = vrot.lane.b32.xlu0 %v197, 64
    %v1336 = vpop.permute.xlu0 %1335
    %v1339 = vsel %vm260, %v952, 0
    %1341 = vmatprep.subr.mxu0 0.0
    %1342 = vmatpush1.msra.mxu0 %v1336
    %1343 = vmatprep.subr.mxu0 0.0
    %1344 = vmatpush1.msra.mxu0 0.0
    %1345 = vmatprep.subr.mxu0 0.0
    %1346 = vmatpush1.msra.mxu0 0.0
    %1347 = vmatprep.subr.mxu0 0.0
    %1348 = vmatpush1.msra.mxu0 0.0
    %1349 = vmatprep.subr.mxu0 0.0
    %1350 = vmatpush1.msra.mxu0 0.0
    %1351 = vmatprep.subr.mxu0 0.0
    %1352 = vmatpush1.msra.mxu0 0.0
    %1353 = vmatprep.subr.mxu0 0.0
    %1354 = vmatpush1.msra.mxu0 0.0
    %1355 = vmatprep.subr.mxu0 0.0
    %1356 = vmatpush1.msra.mxu0 0.0
    %1357 = vmatprep.subr.mxu0 0.0
    %1358 = vmatpush1.msra.mxu0 0.0
    %1359 = vmatprep.subr.mxu0 0.0
    %1360 = vmatpush1.msra.mxu0 0.0
    %1361 = vmatprep.subr.mxu0 0.0
    %1362 = vmatpush1.msra.mxu0 0.0
    %1363 = vmatprep.subr.mxu0 0.0
    %1364 = vmatpush1.msra.mxu0 0.0
    %1365 = vmatprep.subr.mxu0 0.0
    %1366 = vmatpush1.msra.mxu0 0.0
    %1367 = vmatprep.subr.mxu0 0.0
    %1368 = vmatpush1.msra.mxu0 0.0
    %1369 = vmatprep.subr.mxu0 0.0
    %1370 = vmatpush1.msra.mxu0 0.0
    %1371 = vmatprep.subr.mxu0 0.0
    %1372 = vmatpush1.msra.mxu0 0.0
    %1373 = vmatprep.subr.mxu0 0.0
    %1374 = vmatpush1.msra.mxu0 0.0
    %1375 = vmatprep.subr.mxu0 0.0
    %1376 = vmatpush1.msra.mxu0 0.0
    %1377 = vmatprep.subr.mxu0 0.0
    %1378 = vmatpush1.msra.mxu0 0.0
    %1379 = vmatprep.subr.mxu0 0.0
    %1380 = vmatpush1.msra.mxu0 0.0
    %1381 = vmatprep.subr.mxu0 0.0
    %1382 = vmatpush1.msra.mxu0 0.0
    %1383 = vmatprep.subr.mxu0 0.0
    %1384 = vmatpush1.msra.mxu0 0.0
    %1385 = vmatprep.subr.mxu0 0.0
    %1386 = vmatpush1.msra.mxu0 0.0
    %1387 = vmatprep.subr.mxu0 0.0
    %1388 = vmatpush1.msra.mxu0 0.0
    %1389 = vmatprep.subr.mxu0 0.0
    %1390 = vmatpush1.msra.mxu0 0.0
    %1391 = vmatprep.subr.mxu0 0.0
    %1392 = vmatpush1.msra.mxu0 0.0
    %1393 = vmatprep.subr.mxu0 0.0
    %1394 = vmatpush1.msra.mxu0 0.0
    %1395 = vmatprep.subr.mxu0 0.0
    %1396 = vmatpush1.msra.mxu0 0.0
    %1397 = vmatprep.subr.mxu0 0.0
    %1398 = vmatpush1.msra.mxu0 0.0
    %1399 = vmatprep.subr.mxu0 0.0
    %1400 = vmatpush1.msra.mxu0 0.0
    %1401 = vmatprep.subr.mxu0 0.0
    %1402 = vmatpush1.msra.mxu0 0.0
    %1403 = vmatprep.subr.mxu0 0.0
    %1404 = vmatpush1.msra.mxu0 0.0
    %1405 = vmatprep.mubr.f32.mxu0 0.0
    %1406 = vmatmul.mubr.f32.gmra.mrb[0].mxu0 %v1339
    %v1407 = vpop.f32.mrb[0].mxu0
    %v1408 = vadd.f32 0.0, %v1407
    %v1409 = vpop.f32.mrb[0].mxu0
    %1410 = vdwg.mxu0
    %1411 = vrot.lane.b32.xlu0 %v199, 64
    %v1412 = vpop.permute.xlu0 %1411
    %v1415 = vsel %vm260, %v953, 0
    %1417 = vmatprep.subr.mxu0 0.0
    %1418 = vmatpush1.msra.mxu0 %v1412
    %1419 = vmatprep.subr.mxu0 0.0
    %1420 = vmatpush1.msra.mxu0 0.0
    %1421 = vmatprep.subr.mxu0 0.0
    %1422 = vmatpush1.msra.mxu0 0.0
    %1423 = vmatprep.subr.mxu0 0.0
    %1424 = vmatpush1.msra.mxu0 0.0
    %1425 = vmatprep.subr.mxu0 0.0
    %1426 = vmatpush1.msra.mxu0 0.0
    %1427 = vmatprep.subr.mxu0 0.0
    %1428 = vmatpush1.msra.mxu0 0.0
    %1429 = vmatprep.subr.mxu0 0.0
    %1430 = vmatpush1.msra.mxu0 0.0
    %1431 = vmatprep.subr.mxu0 0.0
    %1432 = vmatpush1.msra.mxu0 0.0
    %1433 = vmatprep.subr.mxu0 0.0
    %1434 = vmatpush1.msra.mxu0 0.0
    %1435 = vmatprep.subr.mxu0 0.0
    %1436 = vmatpush1.msra.mxu0 0.0
    %1437 = vmatprep.subr.mxu0 0.0
    %1438 = vmatpush1.msra.mxu0 0.0
    %1439 = vmatprep.subr.mxu0 0.0
    %1440 = vmatpush1.msra.mxu0 0.0
    %1441 = vmatprep.subr.mxu0 0.0
    %1442 = vmatpush1.msra.mxu0 0.0
    %1443 = vmatprep.subr.mxu0 0.0
    %1444 = vmatpush1.msra.mxu0 0.0
    %1445 = vmatprep.subr.mxu0 0.0
    %1446 = vmatpush1.msra.mxu0 0.0
    %1447 = vmatprep.subr.mxu0 0.0
    %1448 = vmatpush1.msra.mxu0 0.0
    %1449 = vmatprep.subr.mxu0 0.0
    %1450 = vmatpush1.msra.mxu0 0.0
    %1451 = vmatprep.subr.mxu0 0.0
    %1452 = vmatpush1.msra.mxu0 0.0
    %1453 = vmatprep.subr.mxu0 0.0
    %1454 = vmatpush1.msra.mxu0 0.0
    %1455 = vmatprep.subr.mxu0 0.0
    %1456 = vmatpush1.msra.mxu0 0.0
    %1457 = vmatprep.subr.mxu0 0.0
    %1458 = vmatpush1.msra.mxu0 0.0
    %1459 = vmatprep.subr.mxu0 0.0
    %1460 = vmatpush1.msra.mxu0 0.0
    %1461 = vmatprep.subr.mxu0 0.0
    %1462 = vmatpush1.msra.mxu0 0.0
    %1463 = vmatprep.subr.mxu0 0.0
    %1464 = vmatpush1.msra.mxu0 0.0
    %1465 = vmatprep.subr.mxu0 0.0
    %1466 = vmatpush1.msra.mxu0 0.0
    %1467 = vmatprep.subr.mxu0 0.0
    %1468 = vmatpush1.msra.mxu0 0.0
    %1469 = vmatprep.subr.mxu0 0.0
    %1470 = vmatpush1.msra.mxu0 0.0
    %1471 = vmatprep.subr.mxu0 0.0
    %1472 = vmatpush1.msra.mxu0 0.0
    %1473 = vmatprep.subr.mxu0 0.0
    %1474 = vmatpush1.msra.mxu0 0.0
    %1475 = vmatprep.subr.mxu0 0.0
    %1476 = vmatpush1.msra.mxu0 0.0
    %1477 = vmatprep.subr.mxu0 0.0
    %1478 = vmatpush1.msra.mxu0 0.0
    %1479 = vmatprep.subr.mxu0 0.0
    %1480 = vmatpush1.msra.mxu0 0.0
    %1481 = vmatprep.mubr.f32.mxu0 0.0
    %1482 = vmatmul.mubr.f32.gmra.mrb[0].mxu0 %v1415
    %v1483 = vpop.f32.mrb[0].mxu0
    %v1484 = vadd.f32 0.0, %v1483
    %v1485 = vpop.f32.mrb[0].mxu0
    %1486 = vdwg.mxu0
    %1487 = vrot.lane.b32.xlu0 %v201, 64
    %v1488 = vpop.permute.xlu0 %1487
    %v1491 = vsel %vm260, %v954, 0
    %1493 = vmatprep.subr.mxu0 0.0
    %1494 = vmatpush1.msra.mxu0 %v1488
    %1495 = vmatprep.subr.mxu0 0.0
    %1496 = vmatpush1.msra.mxu0 0.0
    %1497 = vmatprep.subr.mxu0 0.0
    %1498 = vmatpush1.msra.mxu0 0.0
    %1499 = vmatprep.subr.mxu0 0.0
    %1500 = vmatpush1.msra.mxu0 0.0
    %1501 = vmatprep.subr.mxu0 0.0
    %1502 = vmatpush1.msra.mxu0 0.0
    %1503 = vmatprep.subr.mxu0 0.0
    %1504 = vmatpush1.msra.mxu0 0.0
    %1505 = vmatprep.subr.mxu0 0.0
    %1506 = vmatpush1.msra.mxu0 0.0
    %1507 = vmatprep.subr.mxu0 0.0
    %1508 = vmatpush1.msra.mxu0 0.0
    %1509 = vmatprep.subr.mxu0 0.0
    %1510 = vmatpush1.msra.mxu0 0.0
    %1511 = vmatprep.subr.mxu0 0.0
    %1512 = vmatpush1.msra.mxu0 0.0
    %1513 = vmatprep.subr.mxu0 0.0
    %1514 = vmatpush1.msra.mxu0 0.0
    %1515 = vmatprep.subr.mxu0 0.0
    %1516 = vmatpush1.msra.mxu0 0.0
    %1517 = vmatprep.subr.mxu0 0.0
    %1518 = vmatpush1.msra.mxu0 0.0
    %1519 = vmatprep.subr.mxu0 0.0
    %1520 = vmatpush1.msra.mxu0 0.0
    %1521 = vmatprep.subr.mxu0 0.0
    %1522 = vmatpush1.msra.mxu0 0.0
    %1523 = vmatprep.subr.mxu0 0.0
    %1524 = vmatpush1.msra.mxu0 0.0
    %1525 = vmatprep.subr.mxu0 0.0
    %1526 = vmatpush1.msra.mxu0 0.0
    %1527 = vmatprep.subr.mxu0 0.0
    %1528 = vmatpush1.msra.mxu0 0.0
    %1529 = vmatprep.subr.mxu0 0.0
    %1530 = vmatpush1.msra.mxu0 0.0
    %1531 = vmatprep.subr.mxu0 0.0
    %1532 = vmatpush1.msra.mxu0 0.0
    %1533 = vmatprep.subr.mxu0 0.0
    %1534 = vmatpush1.msra.mxu0 0.0
    %1535 = vmatprep.subr.mxu0 0.0
    %1536 = vmatpush1.msra.mxu0 0.0
    %1537 = vmatprep.subr.mxu0 0.0
    %1538 = vmatpush1.msra.mxu0 0.0
    %1539 = vmatprep.subr.mxu0 0.0
    %1540 = vmatpush1.msra.mxu0 0.0
    %1541 = vmatprep.subr.mxu0 0.0
    %1542 = vmatpush1.msra.mxu0 0.0
    %1543 = vmatprep.subr.mxu0 0.0
    %1544 = vmatpush1.msra.mxu0 0.0
    %1545 = vmatprep.subr.mxu0 0.0
    %1546 = vmatpush1.msra.mxu0 0.0
    %1547 = vmatprep.subr.mxu0 0.0
    %1548 = vmatpush1.msra.mxu0 0.0
    %1549 = vmatprep.subr.mxu0 0.0
    %1550 = vmatpush1.msra.mxu0 0.0
    %1551 = vmatprep.subr.mxu0 0.0
    %1552 = vmatpush1.msra.mxu0 0.0
    %1553 = vmatprep.subr.mxu0 0.0
    %1554 = vmatpush1.msra.mxu0 0.0
    %1555 = vmatprep.subr.mxu0 0.0
    %1556 = vmatpush1.msra.mxu0 0.0
    %1557 = vmatprep.mubr.f32.mxu0 0.0
    %1558 = vmatmul.mubr.f32.gmra.mrb[0].mxu0 %v1491
    %v1559 = vpop.f32.mrb[0].mxu0
    %v1560 = vadd.f32 0.0, %v1559
    %v1561 = vpop.f32.mrb[0].mxu0
    %1562 = vdwg.mxu0
    %1565 = vrot.lane.b32.xlu0 %v1180, 8
    %v1566 = vpop.permute.xlu0 %1565
    %1567 = vrot.lane.b32.xlu0 %v1256, 8
    %v1568 = vpop.permute.xlu0 %1567
    %1573 = vrot.lane.b32.xlu0 %v1332, 16
    %v1574 = vpop.permute.xlu0 %1573
    %1575 = vrot.lane.b32.xlu0 %v1408, 16
    %v1576 = vpop.permute.xlu0 %1575
    %1581 = vrot.lane.b32.xlu0 %v1484, 24
    %v1582 = vpop.permute.xlu0 %1581
    %1583 = vrot.lane.b32.xlu0 %v1560, 24
    %v1584 = vpop.permute.xlu0 %1583
    %v1587 = vsel %vm260, %v1028, %v1566
    %v1588 = vsel %vm260, %v1104, %v1568
    %vm1589 = vcmask 130048
    %v1590 = vsel %vm1589, %v1587, %v1574
    %v1591 = vsel %vm1589, %v1588, %v1576
    %vm1592 = vcmask 195584
    %v1593 = vsel %vm1592, %v1590, %v1582
    %v1594 = vsel %vm1592, %v1591, %v1584
    %v1595 = vld [vmem:[%s6] sm:$0xff]
    %v1596 = vld [vmem:[%s6 + $0x8] sm:$0xff]
    %v1597 = vld [vmem:[%s6 + $0x10] sm:$0xff]
    %v1598 = vld [vmem:[%s6 + $0x18] sm:$0xff]
    %v1599 = vld [vmem:[%s7] sm:$0x1]
    %v1601 = vlaneseq
    %v1602 = vshrl.u32 %v1601, 7
    %v1603 = vsub.s32 0, %v1602
    %v1604 = vrot.slane %v1599, %v1603
    %v1607 = vsel %vm52, %v1593, 0
    %v1610 = vsel %vm52, %v1594, 0
    %1612 = vmatprep.subr.mxu0 0.0
    %1613 = vmatpush1.msra.mxu0 %v1595
    %1614 = vmatprep.subr.mxu0 0.0
    %1615 = vmatpush1.msra.mxu0 %v1596
    %1616 = vmatprep.subr.mxu0 0.0
    %1617 = vmatpush1.msra.mxu0 %v1597
    %1618 = vmatprep.subr.mxu0 0.0
    %1619 = vmatpush1.msra.mxu0 %v1598
    %1620 = vmatprep.subr.mxu0 0.0
    %1621 = vmatpush1.msra.mxu0 0.0
    %1622 = vmatprep.subr.mxu0 0.0
    %1623 = vmatpush1.msra.mxu0 0.0
    %1624 = vmatprep.subr.mxu0 0.0
    %1625 = vmatpush1.msra.mxu0 0.0
    %1626 = vmatprep.subr.mxu0 0.0
    %1627 = vmatpush1.msra.mxu0 0.0
    %1628 = vmatprep.subr.mxu0 0.0
    %1629 = vmatpush1.msra.mxu0 0.0
    %1630 = vmatprep.subr.mxu0 0.0
    %1631 = vmatpush1.msra.mxu0 0.0
    %1632 = vmatprep.subr.mxu0 0.0
    %1633 = vmatpush1.msra.mxu0 0.0
    %1634 = vmatprep.subr.mxu0 0.0
    %1635 = vmatpush1.msra.mxu0 0.0
    %1636 = vmatprep.subr.mxu0 0.0
    %1637 = vmatpush1.msra.mxu0 0.0
    %1638 = vmatprep.subr.mxu0 0.0
    %1639 = vmatpush1.msra.mxu0 0.0
    %1640 = vmatprep.subr.mxu0 0.0
    %1641 = vmatpush1.msra.mxu0 0.0
    %1642 = vmatprep.subr.mxu0 0.0
    %1643 = vmatpush1.msra.mxu0 0.0
    %1644 = vmatprep.subr.mxu0 0.0
    %1645 = vmatpush1.msra.mxu0 0.0
    %1646 = vmatprep.subr.mxu0 0.0
    %1647 = vmatpush1.msra.mxu0 0.0
    %1648 = vmatprep.subr.mxu0 0.0
    %1649 = vmatpush1.msra.mxu0 0.0
    %1650 = vmatprep.subr.mxu0 0.0
    %1651 = vmatpush1.msra.mxu0 0.0
    %1652 = vmatprep.subr.mxu0 0.0
    %1653 = vmatpush1.msra.mxu0 0.0
    %1654 = vmatprep.subr.mxu0 0.0
    %1655 = vmatpush1.msra.mxu0 0.0
    %1656 = vmatprep.subr.mxu0 0.0
    %1657 = vmatpush1.msra.mxu0 0.0
    %1658 = vmatprep.subr.mxu0 0.0
    %1659 = vmatpush1.msra.mxu0 0.0
    %1660 = vmatprep.subr.mxu0 0.0
    %1661 = vmatpush1.msra.mxu0 0.0
    %1662 = vmatprep.subr.mxu0 0.0
    %1663 = vmatpush1.msra.mxu0 0.0
    %1664 = vmatprep.subr.mxu0 0.0
    %1665 = vmatpush1.msra.mxu0 0.0
    %1666 = vmatprep.subr.mxu0 0.0
    %1667 = vmatpush1.msra.mxu0 0.0
    %1668 = vmatprep.subr.mxu0 0.0
    %1669 = vmatpush1.msra.mxu0 0.0
    %1670 = vmatprep.subr.mxu0 0.0
    %1671 = vmatpush1.msra.mxu0 0.0
    %1672 = vmatprep.subr.mxu0 0.0
    %1673 = vmatpush1.msra.mxu0 0.0
    %1674 = vmatprep.subr.mxu0 0.0
    %1675 = vmatpush1.msra.mxu0 0.0
    %1676 = vmatprep.mubr.f32.mxu0 0.0
    %1677 = vmatmul.mubr.f32.gmra.mrb[0].mxu0 %v1607
    %v1678 = vpop.f32.mrb[0].mxu0
    %v1679 = vadd.f32 %v1604, %v1678
    %v1680 = vpop.f32.mrb[0].mxu0
    %1681 = vmatprep.mubr.f32.mxu0 0.0
    %1682 = vmatmul.mubr.f32.gmra.mrb[0].mxu0 %v1610
    %v1683 = vpop.f32.mrb[0].mxu0
    %v1684 = vadd.f32 %v1604, %v1683
    %v1685 = vpop.f32.mrb[0].mxu0
    %1686 = vdwg.mxu0
    %v1687 = vadd.f32 %v48, %v1679
    %v1688 = vadd.f32 %v49, %v1684
    %v1689 = vld [vmem:[%s8] sm:$0x1]
    %v1690 = vld [vmem:[%s9] sm:$0x1]
    %v1691 = vsel %vm52, %v1687, 0.0
    %1692 = vadd.xlane.f32.xlu0 %v1691
    %v1693 = vpop.xlane.xlu0 %1692
    %v1694 = vsel %vm52, %v1688, 0.0
    %1695 = vadd.xlane.f32.xlu0 %v1694
    %v1696 = vpop.xlane.xlu0 %1695
    %v1697 = vmul.f32 %v1693, %v59
    %v1698 = vmul.f32 %v1696, %v59
    %v1699 = vsub.f32 %v1687, %v1697
    %v1700 = vsub.f32 %v1688, %v1698
    %v1701 = vmul.f32 %v1699, %v1699
    %v1702 = vmul.f32 %v1700, %v1700
    %v1703 = vsel %vm52, %v1701, 0.0
    %1704 = vadd.xlane.f32.xlu0 %v1703
    %v1705 = vpop.xlane.xlu0 %1704
    %v1706 = vsel %vm52, %v1702, 0.0
    %1707 = vadd.xlane.f32.xlu0 %v1706
    %v1708 = vpop.xlane.xlu0 %1707
    %v1709 = vmul.f32 %v1705, %v59
    %v1710 = vmul.f32 %v1708, %v59
    %v1711 = vadd.f32 %v1709, 1e-05
    %v1712 = vadd.f32 %v1710, 1e-05
    %v1713 = vrsqrt.pop %v1711
    %v1714 = vrsqrt.pop %v1712
    %v1715 = vmul.f32 %v1699, %v1713
    %v1716 = vmul.f32 %v1700, %v1714
    %v1718 = vlaneseq
    %v1719 = vshrl.u32 %v1718, 7
    %v1720 = vsub.s32 0, %v1719
    %v1721 = vrot.slane %v1689, %v1720
    %v1723 = vmul.f32 %v1715, %v1721
    %v1724 = vmul.f32 %v1716, %v1721
    %v1726 = vlaneseq
    %v1727 = vshrl.u32 %v1726, 7
    %v1728 = vsub.s32 0, %v1727
    %v1729 = vrot.slane %v1690, %v1728
    %v1731 = vadd.f32 %v1723, %v1729
    %v1732 = vadd.f32 %v1724, %v1729
    %v1733 = vld [vmem:[%s10] sm:$0xff]
    %v1734 = vld [vmem:[%s10 + $0x8] sm:$0xff]
    %v1735 = vld [vmem:[%s10 + $0x10] sm:$0xff]
    %v1736 = vld [vmem:[%s10 + $0x18] sm:$0xff]
    %v1737 = vld [vmem:[%s11] sm:$0x1]
    %v1739 = vlaneseq
    %v1740 = vshrl.u32 %v1739, 7
    %v1741 = vsub.s32 0, %v1740
    %v1742 = vrot.slane %v1737, %v1741
    %v1745 = vsel %vm52, %v1731, 0
    %v1748 = vsel %vm52, %v1732, 0
    %1750 = vmatprep.subr.mxu0 0.0
    %1751 = vmatpush1.msra.mxu0 %v1733
    %1752 = vmatprep.subr.mxu0 0.0
    %1753 = vmatpush1.msra.mxu0 %v1734
    %1754 = vmatprep.subr.mxu0 0.0
    %1755 = vmatpush1.msra.mxu0 %v1735
    %1756 = vmatprep.subr.mxu0 0.0
    %1757 = vmatpush1.msra.mxu0 %v1736
    %1758 = vmatprep.subr.mxu0 0.0
    %1759 = vmatpush1.msra.mxu0 0.0
    %1760 = vmatprep.subr.mxu0 0.0
    %1761 = vmatpush1.msra.mxu0 0.0
    %1762 = vmatprep.subr.mxu0 0.0
    %1763 = vmatpush1.msra.mxu0 0.0
    %1764 = vmatprep.subr.mxu0 0.0
    %1765 = vmatpush1.msra.mxu0 0.0
    %1766 = vmatprep.subr.mxu0 0.0
    %1767 = vmatpush1.msra.mxu0 0.0
    %1768 = vmatprep.subr.mxu0 0.0
    %1769 = vmatpush1.msra.mxu0 0.0
    %1770 = vmatprep.subr.mxu0 0.0
    %1771 = vmatpush1.msra.mxu0 0.0
    %1772 = vmatprep.subr.mxu0 0.0
    %1773 = vmatpush1.msra.mxu0 0.0
    %1774 = vmatprep.subr.mxu0 0.0
    %1775 = vmatpush1.msra.mxu0 0.0
    %1776 = vmatprep.subr.mxu0 0.0
    %1777 = vmatpush1.msra.mxu0 0.0
    %1778 = vmatprep.subr.mxu0 0.0
    %1779 = vmatpush1.msra.mxu0 0.0
    %1780 = vmatprep.subr.mxu0 0.0
    %1781 = vmatpush1.msra.mxu0 0.0
    %1782 = vmatprep.subr.mxu0 0.0
    %1783 = vmatpush1.msra.mxu0 0.0
    %1784 = vmatprep.subr.mxu0 0.0
    %1785 = vmatpush1.msra.mxu0 0.0
    %1786 = vmatprep.subr.mxu0 0.0
    %1787 = vmatpush1.msra.mxu0 0.0
    %1788 = vmatprep.subr.mxu0 0.0
    %1789 = vmatpush1.msra.mxu0 0.0
    %1790 = vmatprep.subr.mxu0 0.0
    %1791 = vmatpush1.msra.mxu0 0.0
    %1792 = vmatprep.subr.mxu0 0.0
    %1793 = vmatpush1.msra.mxu0 0.0
    %1794 = vmatprep.subr.mxu0 0.0
    %1795 = vmatpush1.msra.mxu0 0.0
    %1796 = vmatprep.subr.mxu0 0.0
    %1797 = vmatpush1.msra.mxu0 0.0
    %1798 = vmatprep.subr.mxu0 0.0
    %1799 = vmatpush1.msra.mxu0 0.0
    %1800 = vmatprep.subr.mxu0 0.0
    %1801 = vmatpush1.msra.mxu0 0.0
    %1802 = vmatprep.subr.mxu0 0.0
    %1803 = vmatpush1.msra.mxu0 0.0
    %1804 = vmatprep.subr.mxu0 0.0
    %1805 = vmatpush1.msra.mxu0 0.0
    %1806 = vmatprep.subr.mxu0 0.0
    %1807 = vmatpush1.msra.mxu0 0.0
    %1808 = vmatprep.subr.mxu0 0.0
    %1809 = vmatpush1.msra.mxu0 0.0
    %1810 = vmatprep.subr.mxu0 0.0
    %1811 = vmatpush1.msra.mxu0 0.0
    %1812 = vmatprep.subr.mxu0 0.0
    %1813 = vmatpush1.msra.mxu0 0.0
    %1814 = vmatprep.mubr.f32.mxu0 0.0
    %1815 = vmatmul.mubr.f32.gmra.mrb[0].mxu0 %v1745
    %v1816 = vpop.f32.mrb[0].mxu0
    %v1817 = vadd.f32 %v1742, %v1816
    %v1818 = vpop.f32.mrb[0].mxu0
    %1819 = vmatprep.mubr.f32.mxu0 0.0
    %1820 = vmatmul.mubr.f32.gmra.mrb[0].mxu0 %v1748
    %v1821 = vpop.f32.mrb[0].mxu0
    %v1822 = vadd.f32 %v1742, %v1821
    %v1823 = vpop.f32.mrb[0].mxu0
    %1824 = vdwg.mxu0
    %v1825 = vmul.f32 %v1817, 0.5
    %v1826 = vmul.f32 %v1822, 0.5
    %v1827 = vmul.f32 %v1817, 0.70710677
    %v1828 = vmul.f32 %v1822, 0.70710677
    %v1829 = verf.f32.pop %v1827
    %v1830 = verf.f32.pop %v1828
    %v1831 = vadd.f32 %v1829, 1.0
    %v1832 = vadd.f32 %v1830, 1.0
    %v1833 = vmul.f32 %v1825, %v1831
    %v1834 = vmul.f32 %v1826, %v1832
    %v1835 = vld [vmem:[%s12] sm:$0xff]
    %v1836 = vld [vmem:[%s12 + $0x8] sm:$0xff]
    %v1837 = vld [vmem:[%s12 + $0x10] sm:$0xff]
    %v1838 = vld [vmem:[%s12 + $0x18] sm:$0xff]
    %v1839 = vld [vmem:[%s12 + $0x20] sm:$0xff]
    %v1840 = vld [vmem:[%s12 + $0x28] sm:$0xff]
    %v1841 = vld [vmem:[%s12 + $0x30] sm:$0xff]
    %v1842 = vld [vmem:[%s12 + $0x38] sm:$0xff]
    %v1843 = vld [vmem:[%s12 + $0x40] sm:$0xff]
    %v1844 = vld [vmem:[%s12 + $0x48] sm:$0xff]
    %v1845 = vld [vmem:[%s12 + $0x50] sm:$0xff]
    %v1846 = vld [vmem:[%s12 + $0x58] sm:$0xff]
    %v1847 = vld [vmem:[%s12 + $0x60] sm:$0xff]
    %v1848 = vld [vmem:[%s12 + $0x68] sm:$0xff]
    %v1849 = vld [vmem:[%s12 + $0x70] sm:$0xff]
    %v1850 = vld [vmem:[%s12 + $0x78] sm:$0xff]
    %v1851 = vld [vmem:[%s13] sm:$0x1]
    %v1853 = vlaneseq
    %v1854 = vshrl.u32 %v1853, 7
    %v1855 = vsub.s32 0, %v1854
    %v1856 = vrot.slane %v1851, %v1855
    %1858 = vmatprep.subr.mxu0 0.0
    %1859 = vmatpush1.msra.mxu0 %v1835
    %1860 = vmatprep.subr.mxu0 0.0
    %1861 = vmatpush1.msra.mxu0 %v1836
    %1862 = vmatprep.subr.mxu0 0.0
    %1863 = vmatpush1.msra.mxu0 %v1837
    %1864 = vmatprep.subr.mxu0 0.0
    %1865 = vmatpush1.msra.mxu0 %v1838
    %1866 = vmatprep.subr.mxu0 0.0
    %1867 = vmatpush1.msra.mxu0 %v1839
    %1868 = vmatprep.subr.mxu0 0.0
    %1869 = vmatpush1.msra.mxu0 %v1840
    %1870 = vmatprep.subr.mxu0 0.0
    %1871 = vmatpush1.msra.mxu0 %v1841
    %1872 = vmatprep.subr.mxu0 0.0
    %1873 = vmatpush1.msra.mxu0 %v1842
    %1874 = vmatprep.subr.mxu0 0.0
    %1875 = vmatpush1.msra.mxu0 %v1843
    %1876 = vmatprep.subr.mxu0 0.0
    %1877 = vmatpush1.msra.mxu0 %v1844
    %1878 = vmatprep.subr.mxu0 0.0
    %1879 = vmatpush1.msra.mxu0 %v1845
    %1880 = vmatprep.subr.mxu0 0.0
    %1881 = vmatpush1.msra.mxu0 %v1846
    %1882 = vmatprep.subr.mxu0 0.0
    %1883 = vmatpush1.msra.mxu0 %v1847
    %1884 = vmatprep.subr.mxu0 0.0
    %1885 = vmatpush1.msra.mxu0 %v1848
    %1886 = vmatprep.subr.mxu0 0.0
    %1887 = vmatpush1.msra.mxu0 %v1849
    %1888 = vmatprep.subr.mxu0 0.0
    %1889 = vmatpush1.msra.mxu0 %v1850
    %1890 = vmatprep.subr.mxu0 0.0
    %1891 = vmatpush1.msra.mxu0 0.0
    %1892 = vmatprep.subr.mxu0 0.0
    %1893 = vmatpush1.msra.mxu0 0.0
    %1894 = vmatprep.subr.mxu0 0.0
    %1895 = vmatpush1.msra.mxu0 0.0
    %1896 = vmatprep.subr.mxu0 0.0
    %1897 = vmatpush1.msra.mxu0 0.0
    %1898 = vmatprep.subr.mxu0 0.0
    %1899 = vmatpush1.msra.mxu0 0.0
    %1900 = vmatprep.subr.mxu0 0.0
    %1901 = vmatpush1.msra.mxu0 0.0
    %1902 = vmatprep.subr.mxu0 0.0
    %1903 = vmatpush1.msra.mxu0 0.0
    %1904 = vmatprep.subr.mxu0 0.0
    %1905 = vmatpush1.msra.mxu0 0.0
    %1906 = vmatprep.subr.mxu0 0.0
    %1907 = vmatpush1.msra.mxu0 0.0
    %1908 = vmatprep.subr.mxu0 0.0
    %1909 = vmatpush1.msra.mxu0 0.0
    %1910 = vmatprep.subr.mxu0 0.0
    %1911 = vmatpush1.msra.mxu0 0.0
    %1912 = vmatprep.subr.mxu0 0.0
    %1913 = vmatpush1.msra.mxu0 0.0
    %1914 = vmatprep.subr.mxu0 0.0
    %1915 = vmatpush1.msra.mxu0 0.0
    %1916 = vmatprep.subr.mxu0 0.0
    %1917 = vmatpush1.msra.mxu0 0.0
    %1918 = vmatprep.subr.mxu0 0.0
    %1919 = vmatpush1.msra.mxu0 0.0
    %1920 = vmatprep.subr.mxu0 0.0
    %1921 = vmatpush1.msra.mxu0 0.0
    %1922 = vmatprep.mubr.f32.mxu0 0.0
    %1923 = vmatmul.mubr.f32.gmra.mrb[0].mxu0 %v1833
    %v1924 = vpop.f32.mrb[0].mxu0
    %v1925 = vadd.f32 %v1856, %v1924
    %v1926 = vpop.f32.mrb[0].mxu0
    %1927 = vmatprep.mubr.f32.mxu0 0.0
    %1928 = vmatmul.mubr.f32.gmra.mrb[0].mxu0 %v1834
    %v1929 = vpop.f32.mrb[0].mxu0
    %v1930 = vadd.f32 %v1856, %v1929
    %v1931 = vpop.f32.mrb[0].mxu0
    %1932 = vdwg.mxu0
    %v1933 = vadd.f32 %v1687, %v1925
    %v1934 = vadd.f32 %v1688, %v1930
    %1935 = vst.msk [vmem:[#allocation2] sm:$0xff] %vm52, %v1933
    %1936 = vst.msk [vmem:[#allocation2 + $0x8] sm:$0xff] %vm52, %v1934
    // Predicated region
    $region58: #{transformer_block.1} parent=1 // pred_check
      _
    $region59: #{transformer_block.1} parent=1 // pred_check_branch
      %1938 = sbr.rel (0) target = $region61
    $region60: #{transformer_block.1} parent=1 // pred_region
      %s1940 = ssub.s32 256, 256
      %1941 = vsyncadd [#allocation3], %s1940
      %s1942 = sshll.u32 [#allocation2], 4
      %s1943 = int_to_ptr.vmem [resolvable:$true] %s1942
      %1948 = dma.vmem_to_hbm [thread:$0]  %s1943, 256, %s14, [#allocation3], 128, 128, 8
    $region61: #{transformer_block.1} parent=1 // pred_fallthru
      _
    // Predicated region
    $region62: #{transformer_block.1} parent=1 // pred_check
      _
    $region63: #{transformer_block.1} parent=1 // pred_check_branch
      %1950 = sbr.rel (0) target = $region65
    $region64: #{transformer_block.1} parent=1 // pred_region
      %1951 = dma.done [#allocation3], 256
    $region65: #{transformer_block.1} parent=1 // pred_fallthru
      _
    %1952 = vsyncpa [#allocation3], 1

</llo_original>
